<compile_context>
chip_gen: v7x
topology: tpu7x:2x2x1
jax: 0.10.0
libtpu: 0.0.40
codegen_flags: <defaults>
</compile_context>

<pallas_src>
import math

import jax
import jax.numpy as jnp
from jax.experimental import pallas as pl
from jax.experimental.pallas import tpu as pltpu


def _round_up(n, m):
    return ((n + m - 1) // m) * m


# ----------------------------------------------------------------------------
# Kernel: one T-tile of the recurrence per grid step, hidden state carried in
# a persistent VMEM scratch across T tiles.
#   x_ref   : (tt, bb, D)    input features for this time tile (time-major)
#   wi_ref  : (D, 3Hp)       fused input-side weights  [W_ir | W_iz | W_in]
#   wh_ref  : (Hp, 3Hp)      fused hidden-side weights [W_hr | W_hz | W_hn]
#   bi_ref  : (1, 3Hp) f32   fused bias [b_ir+b_hr | b_iz+b_hz | b_in]
#   bhn_ref : (1, Hp)  f32   b_hn (must be applied inside r * (...))
#   hs_ref  : (tt, bb, Hp)   output hidden states for this tile
#   h_carry : (bb, Hp) f32   persistent scratch: hidden state across T tiles
# ----------------------------------------------------------------------------
def _gru_seq_kernel(x_ref, wi_ref, wh_ref, bi_ref, bhn_ref, hs_ref, h_carry):
    tt = x_ref.shape[0]
    Hp = hs_ref.shape[-1]

    # New sequence block starts -> reset the recurrent carry.
    @pl.when(pl.program_id(1) == 0)
    def _():
        h_carry[...] = jnp.zeros_like(h_carry)

    # Small biases hoisted; large weights are indexed inside the dots so they
    # stay in VMEM instead of inflating vreg live ranges.
    bi = bi_ref[...]      # (1, 3Hp)
    bhn = bhn_ref[...]    # (1, Hp)
    mxu_dtype = wh_ref.dtype

    def step(t, h):
        # x-side gate pre-activations: not on the serial dependency, the
        # unrolled scheduler overlaps these dots with the h-side chain.
        gx = jnp.dot(x_ref[t], wi_ref[...],
                     preferred_element_type=jnp.float32) + bi          # (bb, 3Hp)
        # Single fused MXU call for all three hidden-side gates (serial dep).
        gh = jnp.dot(h.astype(mxu_dtype), wh_ref[...],
                     preferred_element_type=jnp.float32)               # (bb, 3Hp)

        # One sigmoid over the concatenated r|z half (2 EUP issues per step).
        rz = jax.nn.sigmoid(gx[:, : 2 * Hp] + gh[:, : 2 * Hp])
        r = rz[:, :Hp]
        z = rz[:, Hp:]
        n = jnp.tanh(gx[:, 2 * Hp:] + r * (gh[:, 2 * Hp:] + bhn))

        h_new = n + z * (h - n)                  # == (1-z)*n + z*h, one op fewer
        hs_ref[t] = h_new.astype(hs_ref.dtype)
        return h_new

    unroll = tt if tt <= 8 else 8                # bounded unroll: no spill blowup
    h_final = jax.lax.fori_loop(0, tt, step, h_carry[...], unroll=unroll)
    h_carry[...] = h_final


def _pick_time_tile(T, target=64):
    tt = min(T, target)
    while T % tt:
        tt -= 1
    return tt


# ----------------------------------------------------------------------------
# Wrapper.
# ----------------------------------------------------------------------------
def event_predictor_forward(x, params, *, compute_dtype=jnp.float32,
                            time_tile=None, batch_block=None):
    """x: (B, T, D) float32 -> logits (B, T, C) float32.

    compute_dtype: dtype of the MXU inputs (x, W_i, W_h) and of the hs
    writeback.  The hidden-state carry, dot accumulation and all gate
    elementwise math are always float32.
    """
    B, T, D = x.shape
    Hp = params["w_h_all"].shape[0]
    G3 = 3 * Hp
    C = params["w_fc_t"].shape[1]

    tt = time_tile if time_tile is not None else _pick_time_tile(T)
    assert T % tt == 0, "time_tile must divide T"
    nt = T // tt

    # Batch-block axis is 'parallel' (v7x megacore); the (8,128) layout rule
    # requires a sub-batch block to be a multiple of 8 sublanes.
    bb = B if batch_block is None else batch_block
    assert B % bb == 0 and (bb == B or bb % 8 == 0)
    nb = B // bb

    # Time-major layout for the kernel (cheap XLA transpose of the smallest
    # stream; gx is no longer materialized at all).
    xt = jnp.transpose(x, (1, 0, 2)).astype(compute_dtype)   # (T, B, D)
    wi = params["w_i_all"].astype(compute_dtype)             # (D, 3Hp)
    wh = params["w_h_all"].astype(compute_dtype)             # (Hp, 3Hp)
    bi = params["b_i_all"]                                   # (1, 3Hp) f32
    bhn = params["b_hn"]                                     # (1, Hp)  f32

    grid_spec = pltpu.PrefetchScalarGridSpec(
        num_scalar_prefetch=0,
        grid=(nb, nt),                        # (parallel batch blocks, serial T)
        in_specs=[
            pl.BlockSpec((tt, bb, D), lambda b, t: (t, b, 0)),    # x tile
            pl.BlockSpec((D, G3), lambda b, t: (0, 0)),           # W_i (resident)
            pl.BlockSpec((Hp, G3), lambda b, t: (0, 0)),          # W_h (resident)
            pl.BlockSpec((1, G3), lambda b, t: (0, 0)),           # fused bias
            pl.BlockSpec((1, Hp), lambda b, t: (0, 0)),           # b_hn
        ],
        out_specs=pl.BlockSpec((tt, bb, Hp), lambda b, t: (t, b, 0)),
        scratch_shapes=[pltpu.VMEM((bb, Hp), jnp.float32)],        # h carry
    )

    hs = pl.pallas_call(
        _gru_seq_kernel,
        out_shape=jax.ShapeDtypeStruct((T, B, Hp), compute_dtype),
        grid_spec=grid_spec,
        compiler_params=pltpu.CompilerParams(
            # batch blocks are independent; the T axis is a strict recurrence.
            dimension_semantics=("parallel", "arbitrary"),
            # Explicit budget: safe on v5e/v6e (128 MiB) and v7x (64 MiB);
            # tiles above are sized far below it.
            vmem_limit_bytes=32 * 1024 * 1024,
        ),
    )(xt, wi, wh, bi, bhn)

    # Hoisted FC head: one (T*B, Hp) @ (Hp, C) matmul in XLA handles the
    # lane-ragged C=4 output and the time-major -> batch-major layout change.
    # Padded Hp rows of w_fc_t are zero, so no slicing is needed.
    logits = jnp.einsum("tbh,hc->btc", hs.astype(jnp.float32),
                        params["w_fc_t"]) + params["b_fc"]
    return logits


# ----------------------------------------------------------------------------
# Parameter init: PyTorch-style uniform(-1/sqrt(H), 1/sqrt(H)).  Returns
# (kernel_params, raw_params): the kernel set is fused / lane-padded /
# pre-transposed; the raw set keeps the nn.GRU / nn.Linear layout for the
# independent reference.
# ----------------------------------------------------------------------------
def init_params(key, input_dim, hidden_dim, num_event_classes):
    D, H, C = input_dim, hidden_dim, num_event_classes
    Hp = _round_up(H, 128)
    k = 1.0 / math.sqrt(H)
    ks = jax.random.split(key, 6)
    u = lambda kk, shape: jax.random.uniform(kk, shape, jnp.float32, -k, k)

    w_ih = u(ks[0], (3 * H, D))   # [W_ir; W_iz; W_in]
    w_hh = u(ks[1], (3 * H, H))   # [W_hr; W_hz; W_hn]
    b_ih = u(ks[2], (3 * H,))
    b_hh = u(ks[3], (3 * H,))
    w_fc = u(ks[4], (C, H))
    b_fc = u(ks[5], (C,))

    raw = {"w_ih": w_ih, "w_hh": w_hh, "b_ih": b_ih, "b_hh": b_hh,
           "w_fc": w_fc, "b_fc": b_fc}

    def split3(m):
        return m[:H], m[H:2 * H], m[2 * H:]

    w_ir, w_iz, w_in = split3(w_ih)
    w_hr, w_hz, w_hn = split3(w_hh)
    b_ir, b_iz, b_in = split3(b_ih)
    b_hr, b_hz, b_hn = split3(b_hh)

    def pad_lanes(m):  # (..., H) -> (..., Hp), zero-padded so pad lanes stay 0
        pad = [(0, 0)] * (m.ndim - 1) + [(0, Hp - H)]
        return jnp.pad(m, pad)

    w_i_all = jnp.concatenate(
        [pad_lanes(w_ir.T), pad_lanes(w_iz.T), pad_lanes(w_in.T)], axis=1)  # (D,3Hp)
    w_h_all = jnp.concatenate(
        [pad_lanes(w_hr.T), pad_lanes(w_hz.T), pad_lanes(w_hn.T)], axis=1)  # (H,3Hp)
    w_h_all = jnp.pad(w_h_all, ((0, Hp - H), (0, 0)))                       # (Hp,3Hp)

    # r/z biases folded (input + hidden); only b_hn stays in-kernel.
    b_i_all = jnp.concatenate(
        [pad_lanes((b_ir + b_hr)[None, :]),
         pad_lanes((b_iz + b_hz)[None, :]),
         pad_lanes(b_in[None, :])], axis=1)                                 # (1,3Hp)
    b_hn_p = pad_lanes(b_hn[None, :])                                       # (1,Hp)

    w_fc_t = jnp.pad(w_fc.T, ((0, Hp - H), (0, 0)))                         # (Hp,C)

    kernel_params = {"w_i_all": w_i_all, "w_h_all": w_h_all,
                     "b_i_all": b_i_all, "b_hn": b_hn_p,
                     "w_fc_t": w_fc_t, "b_fc": b_fc[None, :]}
    return kernel_params, raw


# ----------------------------------------------------------------------------
# Pure-JAX reference (independent lax.scan over the raw PyTorch-layout params).
# ----------------------------------------------------------------------------
def reference_forward(x, raw):
    H = raw["w_hh"].shape[1]
    w_ir, w_iz, w_in = raw["w_ih"][:H], raw["w_ih"][H:2 * H], raw["w_ih"][2 * H:]
    w_hr, w_hz, w_hn = raw["w_hh"][:H], raw["w_hh"][H:2 * H], raw["w_hh"][2 * H:]
    b_ir, b_iz, b_in = raw["b_ih"][:H], raw["b_ih"][H:2 * H], raw["b_ih"][2 * H:]
    b_hr, b_hz, b_hn = raw["b_hh"][:H], raw["b_hh"][H:2 * H], raw["b_hh"][2 * H:]

    B = x.shape[0]
    h0 = jnp.zeros((B, H), jnp.float32)

    def step(h, x_t):
        r = jax.nn.sigmoid(x_t @ w_ir.T + b_ir + h @ w_hr.T + b_hr)
        z = jax.nn.sigmoid(x_t @ w_iz.T + b_iz + h @ w_hz.T + b_hz)
        n = jnp.tanh(x_t @ w_in.T + b_in + r * (h @ w_hn.T + b_hn))
        h_new = (1.0 - z) * n + z * h
        return h_new, h_new

    _, hs = jax.lax.scan(step, h0, jnp.transpose(x, (1, 0, 2)))   # (T, B, H)
    gru_out = jnp.transpose(hs, (1, 0, 2))                        # (B, T, H)
    return gru_out @ raw["w_fc"].T + raw["b_fc"]


if __name__ == "__main__":
    # input_dim=16, seq=8, batch=2, hidden_dim=32 (padded to 128 lanes), classes=4
    B, T, D, H, C = 2, 8, 16, 32, 4

    key = jax.random.PRNGKey(0)
    kx, kp = jax.random.split(key)
    x = jax.random.normal(kx, (B, T, D), jnp.float32)
    kernel_params, raw_params = init_params(kp, D, H, C)

    ref = reference_forward(x, raw_params)

    # 1) Full-f32 run: tight check of kernel structure / lane padding / T-tile carry
    #    (time_tile=4 -> 2 time tiles, so the cross-tile VMEM carry is exercised).
    fwd_f32 = jax.jit(lambda xx: event_predictor_forward(
        xx, kernel_params, compute_dtype=jnp.float32, time_tile=4))
    out_f32 = jax.block_until_ready(fwd_f32(x))
    assert out_f32.shape == (B, T, C)
    err_f32 = float(jnp.max(jnp.abs(out_f32 - ref)))
    assert err_f32 < 1e-4, f"f32 max abs err = {err_f32}"

    # 2) bf16 MXU-input run (halves the dominant HBM/DMA streams on v6e/v7x);
    #    carry / accumulation / gate math stay f32, so only a loose check applies.
    fwd_bf16 = jax.jit(lambda xx: event_predictor_forward(
        xx, kernel_params, compute_dtype=jnp.bfloat16, time_tile=4))
    out_bf16 = jax.block_until_ready(fwd_bf16(x))
    err_bf16 = float(jnp.max(jnp.abs(out_bf16 - ref)))
    assert err_bf16 < 5e-2, f"bf16 max abs err = {err_bf16}"

    # TODO(synk): num_layers > 1 / bidirectional GRU variants are not implemented
    # (module defaults are 1 layer, unidirectional).
    print("KERNEL_OK")
</pallas_src>

<mosaic_0001>
module attributes {stable_mosaic.version = 11 : i64} {
  func.func @_gru_seq_kernel(%arg0: i32, %arg1: i32, %arg2: memref<4x2x16xf32, #tpu.memory_space<vmem>>, %arg3: memref<16x384xf32, #tpu.memory_space<vmem>>, %arg4: memref<128x384xf32, #tpu.memory_space<vmem>>, %arg5: memref<1x384xf32, #tpu.memory_space<vmem>>, %arg6: memref<1x128xf32, #tpu.memory_space<vmem>>, %arg7: memref<4x2x128xf32, #tpu.memory_space<vmem>>, %arg8: memref<2x128xf32, #tpu.memory_space<vmem>>) attributes {dimension_semantics = [#tpu.dimension_semantics<parallel>, #tpu.dimension_semantics<arbitrary>], iteration_bounds = array<i64: 1, 2>, scalar_prefetch = 0 : i64, scratch_operands = 1 : i64, tpu.core_type = #tpu.core_type<tc>, window_params = [{transform_indices = @transform_0, window_bounds = array<i64: 4, 2, 16>}, {pipeline_mode = #tpu.pipeline_mode<synchronous>, transform_indices = @transform_1, window_bounds = array<i64: 16, 384>}, {pipeline_mode = #tpu.pipeline_mode<synchronous>, transform_indices = @transform_2, window_bounds = array<i64: 128, 384>}, {pipeline_mode = #tpu.pipeline_mode<synchronous>, transform_indices = @transform_3, window_bounds = array<i64: 1, 384>}, {pipeline_mode = #tpu.pipeline_mode<synchronous>, transform_indices = @transform_4, window_bounds = array<i64: 1, 128>}, {transform_indices = @transform_5, window_bounds = array<i64: 4, 2, 128>}]} {
    %c0_i32 = arith.constant 0 : i32
    %0 = arith.cmpi eq, %arg1, %c0_i32 : i32
    %1 = arith.extui %0 : i1 to i32
    %c0_i32_0 = arith.constant 0 : i32
    %2 = arith.cmpi ne, %1, %c0_i32_0 : i32
    scf.if %2 {
      %cst_52 = arith.constant 0.000000e+00 : f32
      %139 = vector.broadcast %cst_52 : f32 to vector<2x128xf32>
      %c0_53 = arith.constant 0 : index
      %c0_54 = arith.constant 0 : index
      %140 = vector.load %arg8[%c0_53, %c0_54] : memref<2x128xf32, #tpu.memory_space<vmem>>, vector<2x128xf32>
      tpu.vector_store %arg8[%c0_53, %c0_54], %139 {strides = array<i32>} : memref<2x128xf32, #tpu.memory_space<vmem>>, vector<2x128xf32>,
    } else {
    }
    %c0 = arith.constant 0 : index
    %c0_1 = arith.constant 0 : index
    %3 = vector.load %arg5[%c0, %c0_1] : memref<1x384xf32, #tpu.memory_space<vmem>>, vector<1x384xf32>
    %c0_2 = arith.constant 0 : index
    %c0_3 = arith.constant 0 : index
    %4 = vector.load %arg6[%c0_2, %c0_3] : memref<1x128xf32, #tpu.memory_space<vmem>>, vector<1x128xf32>
    %c0_4 = arith.constant 0 : index
    %c0_5 = arith.constant 0 : index
    %5 = vector.load %arg8[%c0_4, %c0_5] : memref<2x128xf32, #tpu.memory_space<vmem>>, vector<2x128xf32>
    %c0_i32_6 = arith.constant 0 : i32
    %6 = arith.index_cast %c0_i32_6 : i32 to index
    %c0_7 = arith.constant 0 : index
    %c0_8 = arith.constant 0 : index
    %7 = vector.load %arg2[%6, %c0_7, %c0_8] : memref<4x2x16xf32, #tpu.memory_space<vmem>>, vector<1x2x16xf32>
    %8 = vector.shape_cast %7 : vector<1x2x16xf32> to vector<2x16xf32>
    %c0_9 = arith.constant 0 : index
    %c0_10 = arith.constant 0 : index
    %9 = vector.load %arg3[%c0_9, %c0_10] : memref<16x384xf32, #tpu.memory_space<vmem>>, vector<16x384xf32>
    %cst = arith.constant dense<0.000000e+00> : vector<2x384xf32>
    %10 = tpu.matmul %8, %9, %cst {dimension_numbers = #tpu.dot_dimension_numbers<[1], [0], [0], [1], [0, 0, 1, 1], [], []>} : vector<2x16xf32>, vector<16x384xf32>, vector<2x384xf32> -> vector<2x384xf32>
    %11 = vector.broadcast %3 : vector<1x384xf32> to vector<2x384xf32>
    %12 = arith.addf %10, %11 : vector<2x384xf32>
    %c0_11 = arith.constant 0 : index
    %c0_12 = arith.constant 0 : index
    %13 = vector.load %arg4[%c0_11, %c0_12] : memref<128x384xf32, #tpu.memory_space<vmem>>, vector<128x384xf32>
    %cst_13 = arith.constant dense<0.000000e+00> : vector<2x384xf32>
    %14 = tpu.matmul %5, %13, %cst_13 {dimension_numbers = #tpu.dot_dimension_numbers<[1], [0], [0], [1], [0, 0, 1, 1], [], []>} : vector<2x128xf32>, vector<128x384xf32>, vector<2x384xf32> -> vector<2x384xf32>
    %15 = vector.extract_strided_slice %12 {offsets = [0, 0], sizes = [2, 256], strides = [1, 1]} : vector<2x384xf32> to vector<2x256xf32>
    %16 = vector.extract_strided_slice %14 {offsets = [0, 0], sizes = [2, 256], strides = [1, 1]} : vector<2x384xf32> to vector<2x256xf32>
    %17 = arith.addf %15, %16 : vector<2x256xf32>
    %18 = arith.negf %17 : vector<2x256xf32>
    %19 = math.exp %18 : vector<2x256xf32>
    %cst_14 = arith.constant 1.000000e+00 : f32
    %20 = vector.broadcast %cst_14 : f32 to vector<2x256xf32>
    %21 = arith.addf %20, %19 : vector<2x256xf32>
    %22 = arith.divf %20, %21 : vector<2x256xf32>
    %23 = vector.extract_strided_slice %22 {offsets = [0, 0], sizes = [2, 128], strides = [1, 1]} : vector<2x256xf32> to vector<2x128xf32>
    %24 = vector.extract_strided_slice %22 {offsets = [0, 128], sizes = [2, 128], strides = [1, 1]} : vector<2x256xf32> to vector<2x128xf32>
    %25 = vector.extract_strided_slice %12 {offsets = [0, 256], sizes = [2, 128], strides = [1, 1]} : vector<2x384xf32> to vector<2x128xf32>
    %26 = vector.extract_strided_slice %14 {offsets = [0, 256], sizes = [2, 128], strides = [1, 1]} : vector<2x384xf32> to vector<2x128xf32>
    %27 = vector.broadcast %4 : vector<1x128xf32> to vector<2x128xf32>
    %28 = arith.addf %26, %27 : vector<2x128xf32>
    %29 = arith.mulf %23, %28 : vector<2x128xf32>
    %30 = arith.addf %25, %29 : vector<2x128xf32>
    %31 = math.tanh %30 : vector<2x128xf32>
    %32 = arith.subf %5, %31 : vector<2x128xf32>
    %33 = arith.mulf %24, %32 : vector<2x128xf32>
    %34 = arith.addf %31, %33 : vector<2x128xf32>
    %35 = arith.index_cast %c0_i32_6 : i32 to index
    %c0_15 = arith.constant 0 : index
    %c0_16 = arith.constant 0 : index
    %36 = vector.load %arg7[%35, %c0_15, %c0_16] : memref<4x2x128xf32, #tpu.memory_space<vmem>>, vector<1x2x128xf32>
    %37 = vector.shape_cast %36 : vector<1x2x128xf32> to vector<2x128xf32>
    %38 = vector.shape_cast %34 : vector<2x128xf32> to vector<1x2x128xf32>
    tpu.vector_store %arg7[%35, %c0_15, %c0_16], %38 {strides = array<i32>} : memref<4x2x128xf32, #tpu.memory_space<vmem>>, vector<1x2x128xf32>,
    %c1_i32 = arith.constant 1 : i32
    %39 = arith.index_cast %c1_i32 : i32 to index
    %c0_17 = arith.constant 0 : index
    %c0_18 = arith.constant 0 : index
    %40 = vector.load %arg2[%39, %c0_17, %c0_18] : memref<4x2x16xf32, #tpu.memory_space<vmem>>, vector<1x2x16xf32>
    %41 = vector.shape_cast %40 : vector<1x2x16xf32> to vector<2x16xf32>
    %c0_19 = arith.constant 0 : index
    %c0_20 = arith.constant 0 : index
    %42 = vector.load %arg3[%c0_19, %c0_20] : memref<16x384xf32, #tpu.memory_space<vmem>>, vector<16x384xf32>
    %cst_21 = arith.constant dense<0.000000e+00> : vector<2x384xf32>
    %43 = tpu.matmul %41, %42, %cst_21 {dimension_numbers = #tpu.dot_dimension_numbers<[1], [0], [0], [1], [0, 0, 1, 1], [], []>} : vector<2x16xf32>, vector<16x384xf32>, vector<2x384xf32> -> vector<2x384xf32>
    %44 = vector.broadcast %3 : vector<1x384xf32> to vector<2x384xf32>
    %45 = arith.addf %43, %44 : vector<2x384xf32>
    %c0_22 = arith.constant 0 : index
    %c0_23 = arith.constant 0 : index
    %46 = vector.load %arg4[%c0_22, %c0_23] : memref<128x384xf32, #tpu.memory_space<vmem>>, vector<128x384xf32>
    %cst_24 = arith.constant dense<0.000000e+00> : vector<2x384xf32>
    %47 = tpu.matmul %34, %46, %cst_24 {dimension_numbers = #tpu.dot_dimension_numbers<[1], [0], [0], [1], [0, 0, 1, 1], [], []>} : vector<2x128xf32>, vector<128x384xf32>, vector<2x384xf32> -> vector<2x384xf32>
    %48 = vector.extract_strided_slice %45 {offsets = [0, 0], sizes = [2, 256], strides = [1, 1]} : vector<2x384xf32> to vector<2x256xf32>
    %49 = vector.extract_strided_slice %47 {offsets = [0, 0], sizes = [2, 256], strides = [1, 1]} : vector<2x384xf32> to vector<2x256xf32>
    %50 = arith.addf %48, %49 : vector<2x256xf32>
    %51 = arith.negf %50 : vector<2x256xf32>
    %52 = math.exp %51 : vector<2x256xf32>
    %cst_25 = arith.constant 1.000000e+00 : f32
    %53 = vector.broadcast %cst_25 : f32 to vector<2x256xf32>
    %54 = arith.addf %53, %52 : vector<2x256xf32>
    %55 = arith.divf %53, %54 : vector<2x256xf32>
    %56 = vector.extract_strided_slice %55 {offsets = [0, 0], sizes = [2, 128], strides = [1, 1]} : vector<2x256xf32> to vector<2x128xf32>
    %57 = vector.extract_strided_slice %55 {offsets = [0, 128], sizes = [2, 128], strides = [1, 1]} : vector<2x256xf32> to vector<2x128xf32>
    %58 = vector.extract_strided_slice %45 {offsets = [0, 256], sizes = [2, 128], strides = [1, 1]} : vector<2x384xf32> to vector<2x128xf32>
    %59 = vector.extract_strided_slice %47 {offsets = [0, 256], sizes = [2, 128], strides = [1, 1]} : vector<2x384xf32> to vector<2x128xf32>
    %60 = vector.broadcast %4 : vector<1x128xf32> to vector<2x128xf32>
    %61 = arith.addf %59, %60 : vector<2x128xf32>
    %62 = arith.mulf %56, %61 : vector<2x128xf32>
    %63 = arith.addf %58, %62 : vector<2x128xf32>
    %64 = math.tanh %63 : vector<2x128xf32>
    %65 = arith.subf %34, %64 : vector<2x128xf32>
    %66 = arith.mulf %57, %65 : vector<2x128xf32>
    %67 = arith.addf %64, %66 : vector<2x128xf32>
    %68 = arith.index_cast %c1_i32 : i32 to index
    %c0_26 = arith.constant 0 : index
    %c0_27 = arith.constant 0 : index
    %69 = vector.load %arg7[%68, %c0_26, %c0_27] : memref<4x2x128xf32, #tpu.memory_space<vmem>>, vector<1x2x128xf32>
    %70 = vector.shape_cast %69 : vector<1x2x128xf32> to vector<2x128xf32>
    %71 = vector.shape_cast %67 : vector<2x128xf32> to vector<1x2x128xf32>
    tpu.vector_store %arg7[%68, %c0_26, %c0_27], %71 {strides = array<i32>} : memref<4x2x128xf32, #tpu.memory_space<vmem>>, vector<1x2x128xf32>,
    %c2_i32 = arith.constant 2 : i32
    %72 = arith.index_cast %c2_i32 : i32 to index
    %c0_28 = arith.constant 0 : index
    %c0_29 = arith.constant 0 : index
    %73 = vector.load %arg2[%72, %c0_28, %c0_29] : memref<4x2x16xf32, #tpu.memory_space<vmem>>, vector<1x2x16xf32>
    %74 = vector.shape_cast %73 : vector<1x2x16xf32> to vector<2x16xf32>
    %c0_30 = arith.constant 0 : index
    %c0_31 = arith.constant 0 : index
    %75 = vector.load %arg3[%c0_30, %c0_31] : memref<16x384xf32, #tpu.memory_space<vmem>>, vector<16x384xf32>
    %cst_32 = arith.constant dense<0.000000e+00> : vector<2x384xf32>
    %76 = tpu.matmul %74, %75, %cst_32 {dimension_numbers = #tpu.dot_dimension_numbers<[1], [0], [0], [1], [0, 0, 1, 1], [], []>} : vector<2x16xf32>, vector<16x384xf32>, vector<2x384xf32> -> vector<2x384xf32>
    %77 = vector.broadcast %3 : vector<1x384xf32> to vector<2x384xf32>
    %78 = arith.addf %76, %77 : vector<2x384xf32>
    %c0_33 = arith.constant 0 : index
    %c0_34 = arith.constant 0 : index
    %79 = vector.load %arg4[%c0_33, %c0_34] : memref<128x384xf32, #tpu.memory_space<vmem>>, vector<128x384xf32>
    %cst_35 = arith.constant dense<0.000000e+00> : vector<2x384xf32>
    %80 = tpu.matmul %67, %79, %cst_35 {dimension_numbers = #tpu.dot_dimension_numbers<[1], [0], [0], [1], [0, 0, 1, 1], [], []>} : vector<2x128xf32>, vector<128x384xf32>, vector<2x384xf32> -> vector<2x384xf32>
    %81 = vector.extract_strided_slice %78 {offsets = [0, 0], sizes = [2, 256], strides = [1, 1]} : vector<2x384xf32> to vector<2x256xf32>
    %82 = vector.extract_strided_slice %80 {offsets = [0, 0], sizes = [2, 256], strides = [1, 1]} : vector<2x384xf32> to vector<2x256xf32>
    %83 = arith.addf %81, %82 : vector<2x256xf32>
    %84 = arith.negf %83 : vector<2x256xf32>
    %85 = math.exp %84 : vector<2x256xf32>
    %cst_36 = arith.constant 1.000000e+00 : f32
    %86 = vector.broadcast %cst_36 : f32 to vector<2x256xf32>
    %87 = arith.addf %86, %85 : vector<2x256xf32>
    %88 = arith.divf %86, %87 : vector<2x256xf32>
    %89 = vector.extract_strided_slice %88 {offsets = [0, 0], sizes = [2, 128], strides = [1, 1]} : vector<2x256xf32> to vector<2x128xf32>
    %90 = vector.extract_strided_slice %88 {offsets = [0, 128], sizes = [2, 128], strides = [1, 1]} : vector<2x256xf32> to vector<2x128xf32>
    %91 = vector.extract_strided_slice %78 {offsets = [0, 256], sizes = [2, 128], strides = [1, 1]} : vector<2x384xf32> to vector<2x128xf32>
    %92 = vector.extract_strided_slice %80 {offsets = [0, 256], sizes = [2, 128], strides = [1, 1]} : vector<2x384xf32> to vector<2x128xf32>
    %93 = vector.broadcast %4 : vector<1x128xf32> to vector<2x128xf32>
    %94 = arith.addf %92, %93 : vector<2x128xf32>
    %95 = arith.mulf %89, %94 : vector<2x128xf32>
    %96 = arith.addf %91, %95 : vector<2x128xf32>
    %97 = math.tanh %96 : vector<2x128xf32>
    %98 = arith.subf %67, %97 : vector<2x128xf32>
    %99 = arith.mulf %90, %98 : vector<2x128xf32>
    %100 = arith.addf %97, %99 : vector<2x128xf32>
    %101 = arith.index_cast %c2_i32 : i32 to index
    %c0_37 = arith.constant 0 : index
    %c0_38 = arith.constant 0 : index
    %102 = vector.load %arg7[%101, %c0_37, %c0_38] : memref<4x2x128xf32, #tpu.memory_space<vmem>>, vector<1x2x128xf32>
    %103 = vector.shape_cast %102 : vector<1x2x128xf32> to vector<2x128xf32>
    %104 = vector.shape_cast %100 : vector<2x128xf32> to vector<1x2x128xf32>
    tpu.vector_store %arg7[%101, %c0_37, %c0_38], %104 {strides = array<i32>} : memref<4x2x128xf32, #tpu.memory_space<vmem>>, vector<1x2x128xf32>,
    %c3_i32 = arith.constant 3 : i32
    %105 = arith.index_cast %c3_i32 : i32 to index
    %c0_39 = arith.constant 0 : index
    %c0_40 = arith.constant 0 : index
    %106 = vector.load %arg2[%105, %c0_39, %c0_40] : memref<4x2x16xf32, #tpu.memory_space<vmem>>, vector<1x2x16xf32>
    %107 = vector.shape_cast %106 : vector<1x2x16xf32> to vector<2x16xf32>
    %c0_41 = arith.constant 0 : index
    %c0_42 = arith.constant 0 : index
    %108 = vector.load %arg3[%c0_41, %c0_42] : memref<16x384xf32, #tpu.memory_space<vmem>>, vector<16x384xf32>
    %cst_43 = arith.constant dense<0.000000e+00> : vector<2x384xf32>
    %109 = tpu.matmul %107, %108, %cst_43 {dimension_numbers = #tpu.dot_dimension_numbers<[1], [0], [0], [1], [0, 0, 1, 1], [], []>} : vector<2x16xf32>, vector<16x384xf32>, vector<2x384xf32> -> vector<2x384xf32>
    %110 = vector.broadcast %3 : vector<1x384xf32> to vector<2x384xf32>
    %111 = arith.addf %109, %110 : vector<2x384xf32>
    %c0_44 = arith.constant 0 : index
    %c0_45 = arith.constant 0 : index
    %112 = vector.load %arg4[%c0_44, %c0_45] : memref<128x384xf32, #tpu.memory_space<vmem>>, vector<128x384xf32>
    %cst_46 = arith.constant dense<0.000000e+00> : vector<2x384xf32>
    %113 = tpu.matmul %100, %112, %cst_46 {dimension_numbers = #tpu.dot_dimension_numbers<[1], [0], [0], [1], [0, 0, 1, 1], [], []>} : vector<2x128xf32>, vector<128x384xf32>, vector<2x384xf32> -> vector<2x384xf32>
    %114 = vector.extract_strided_slice %111 {offsets = [0, 0], sizes = [2, 256], strides = [1, 1]} : vector<2x384xf32> to vector<2x256xf32>
    %115 = vector.extract_strided_slice %113 {offsets = [0, 0], sizes = [2, 256], strides = [1, 1]} : vector<2x384xf32> to vector<2x256xf32>
    %116 = arith.addf %114, %115 : vector<2x256xf32>
    %117 = arith.negf %116 : vector<2x256xf32>
    %118 = math.exp %117 : vector<2x256xf32>
    %cst_47 = arith.constant 1.000000e+00 : f32
    %119 = vector.broadcast %cst_47 : f32 to vector<2x256xf32>
    %120 = arith.addf %119, %118 : vector<2x256xf32>
    %121 = arith.divf %119, %120 : vector<2x256xf32>
    %122 = vector.extract_strided_slice %121 {offsets = [0, 0], sizes = [2, 128], strides = [1, 1]} : vector<2x256xf32> to vector<2x128xf32>
    %123 = vector.extract_strided_slice %121 {offsets = [0, 128], sizes = [2, 128], strides = [1, 1]} : vector<2x256xf32> to vector<2x128xf32>
    %124 = vector.extract_strided_slice %111 {offsets = [0, 256], sizes = [2, 128], strides = [1, 1]} : vector<2x384xf32> to vector<2x128xf32>
    %125 = vector.extract_strided_slice %113 {offsets = [0, 256], sizes = [2, 128], strides = [1, 1]} : vector<2x384xf32> to vector<2x128xf32>
    %126 = vector.broadcast %4 : vector<1x128xf32> to vector<2x128xf32>
    %127 = arith.addf %125, %126 : vector<2x128xf32>
    %128 = arith.mulf %122, %127 : vector<2x128xf32>
    %129 = arith.addf %124, %128 : vector<2x128xf32>
    %130 = math.tanh %129 : vector<2x128xf32>
    %131 = arith.subf %100, %130 : vector<2x128xf32>
    %132 = arith.mulf %123, %131 : vector<2x128xf32>
    %133 = arith.addf %130, %132 : vector<2x128xf32>
    %134 = arith.index_cast %c3_i32 : i32 to index
    %c0_48 = arith.constant 0 : index
    %c0_49 = arith.constant 0 : index
    %135 = vector.load %arg7[%134, %c0_48, %c0_49] : memref<4x2x128xf32, #tpu.memory_space<vmem>>, vector<1x2x128xf32>
    %136 = vector.shape_cast %135 : vector<1x2x128xf32> to vector<2x128xf32>
    %137 = vector.shape_cast %133 : vector<2x128xf32> to vector<1x2x128xf32>
    tpu.vector_store %arg7[%134, %c0_48, %c0_49], %137 {strides = array<i32>} : memref<4x2x128xf32, #tpu.memory_space<vmem>>, vector<1x2x128xf32>,
    %c4_i32 = arith.constant 4 : i32
    %c0_50 = arith.constant 0 : index
    %c0_51 = arith.constant 0 : index
    %138 = vector.load %arg8[%c0_50, %c0_51] : memref<2x128xf32, #tpu.memory_space<vmem>>, vector<2x128xf32>
    tpu.vector_store %arg8[%c0_50, %c0_51], %133 {strides = array<i32>} : memref<2x128xf32, #tpu.memory_space<vmem>>, vector<2x128xf32>,
    return
  }
  func.func @transform_0(%arg0: i32, %arg1: i32) -> (i32, i32, i32) {
    %c0_i32 = arith.constant 0 : i32
    %c0_i32_0 = arith.constant 0 : i32
    return %arg1, %arg0, %c0_i32 : i32, i32, i32
  }
  func.func @transform_1(%arg0: i32, %arg1: i32) -> (i32, i32) {
    %c0_i32 = arith.constant 0 : i32
    %c0_i32_0 = arith.constant 0 : i32
    %c0_i32_1 = arith.constant 0 : i32
    return %c0_i32, %c0_i32_0 : i32, i32
  }
  func.func @transform_2(%arg0: i32, %arg1: i32) -> (i32, i32) {
    %c0_i32 = arith.constant 0 : i32
    %c0_i32_0 = arith.constant 0 : i32
    %c0_i32_1 = arith.constant 0 : i32
    return %c0_i32, %c0_i32_0 : i32, i32
  }
  func.func @transform_3(%arg0: i32, %arg1: i32) -> (i32, i32) {
    %c0_i32 = arith.constant 0 : i32
    %c0_i32_0 = arith.constant 0 : i32
    %c0_i32_1 = arith.constant 0 : i32
    return %c0_i32, %c0_i32_0 : i32, i32
  }
  func.func @transform_4(%arg0: i32, %arg1: i32) -> (i32, i32) {
    %c0_i32 = arith.constant 0 : i32
    %c0_i32_0 = arith.constant 0 : i32
    %c0_i32_1 = arith.constant 0 : i32
    return %c0_i32, %c0_i32_0 : i32, i32
  }
  func.func @transform_5(%arg0: i32, %arg1: i32) -> (i32, i32, i32) {
    %c0_i32 = arith.constant 0 : i32
    %c0_i32_0 = arith.constant 0 : i32
    return %arg1, %arg0, %c0_i32 : i32, i32, i32
  }
}

</mosaic_0001>

<llo_original>
// kernel: _lambda_.1
$region0: #{_lambda_.1}
  #allocation0 [shape = 'u32[]', space=smem, size = 0x4, offset = 0x4, fixed_abs, tag = 'smem constant byte address 0x4 - core index']
  #allocation1 [shape = 'u32[144,128]{1,0:T(1,128)}', space=vmem, size = 0x12000, scoped, tag = 'internal scratch']
  #allocation2 [shape = 'f32[2,128]{1,0:T(2,128)}', space=vmem, size = 0x400, scoped, tag = 'scratch operand']
  %s0 = inlined_call_operand.vmem [shape: f32[8,2,16], index: 0, kind: input, shape index: {}]
  %s1 = inlined_call_operand.hbm [shape: f32[16,384], index: 1, kind: input, shape index: {}]
  %s2 = inlined_call_operand.hbm [shape: f32[128,384], index: 2, kind: input, shape index: {}]
  %s3 = inlined_call_operand.vmem [shape: f32[1,384], index: 3, kind: input, shape index: {}]
  %s4 = inlined_call_operand.vmem [shape: f32[1,128], index: 4, kind: input, shape index: {}]
  %s5 = inlined_call_operand.vmem [shape: f32[8,2,128], index: 5, kind: output, shape index: {}]
  %s6 = sld [smem:[#allocation0]]
  $region65: #{_lambda_.1} parent=0
    _
  %s8 = ssub.s32 1, %s6
  %s9 = scalar_select 0, %s8, %s6
  $region1: #{_lambda_.1} parent=0
    #allocation3 [shape = 'u8[24576]{0}', space=vmem, size = 0x6000, scoped, tag = 'input window, operand 1, single buffered']
    #allocation4 [shape = 's32[2]{0}', space=sflag, size = 0x8, scoped, tag = 'scoped memory for _lambda_.1']
    #allocation5 [shape = 'u8[196608]{0}', space=vmem, size = 0x30000, scoped, tag = 'input window, operand 2, single buffered']
    #allocation6 [shape = 's32[1]{0}', space=sflag, size = 0x4, scoped, tag = 'scoped memory for _lambda_.1']
    %10 = vsyncpa [#allocation4], 0
    %11 = vsyncpa [#allocation6], 0
    loop: start=0, step=1, limit=4
    $region2: #{_lambda_.1} parent=1 // loop_pre_header
      _
    $region3: #{_lambda_.1} parent=1 // loop_header
      %s13 = sphi 0, %s17
      %p14 = scmp.ge.s32.totalorder %s13, 4
      %s20 = sphi 0, %s32
      %s21 = sphi 0, %s28
      %s22 = sphi 0, %s20
      %s23 = sphi 0, %s21
      %s24 = sphi 0, %s22
      %s25 = sphi 0, %s23
      %s37 = sphi 0, %s39
      %s40 = sphi 0, %s37
      %s41 = sphi 0, %s40
      %s57 = sphi 0, %s41
      %s61 = sphi 0, %s61
      %s63 = sphi 0, %s61
      %s64 = sphi 0, %s63
      %s78 = sphi 0, %s64
      %s82 = sphi 0, %s82
      %s84 = sphi 0, %s82
      %s85 = sphi 0, %s84
      %s99 = sphi 0, %s85
      %s103 = sphi 0, %s103
      %s105 = sphi 0, %s103
      %s106 = sphi 0, %s105
      %s120 = sphi 0, %s106
      %s124 = sphi 0, %s124
      %s126 = sphi 0, %s124
      %s127 = sphi 0, %s126
      %s141 = sphi 0, %s127
      %s149 = sphi 0, %s151
      %s152 = sphi 0, %s149
      %s153 = sphi 0, %s152
      %s169 = sphi 0, %s153
    $region4: #{_lambda_.1} parent=1 // loop_header_branch
      %16 = sbr.rel (%p14) target = $region8
    $region5: #{_lambda_.1} parent=1 // loop_body
      %s18 = ssub.s32 %s13, 1
      %s19 = ssub.s32 %s13, 2
      %s26 = sadd.s32 1, %s21
      %p27 = scmp.ge.s32.totalorder %s26, 2
      %s28 = scalar_select %p27, 0, %s26
      %s29 = sadd.s32 1, %s20
      %s30 = scalar_select %p27, %s29, %s20
      %p31 = scmp.ge.s32.totalorder %s30, 1
      %s32 = scalar_select %p31, 0, %s30
      %s33 = ssub.s32 %s21, %s28
      %s34 = ssub.s32 %s20, %s32
      %s35 = sor.u32 %s33, %s34
      %p36 = scmp.eq.s32.totalorder %s35, 0
      %s38 = sadd.s32 %s37, 1
      %s39 = scalar_select %p36, %s37, %s38
      %p42 = pneg %p36
      %p43 = scmp.eq.s32.totalorder %s13, 1
      %p44 = por %p42, %p43
      %p45 = scmp.ne.s32.totalorder %s37, %s40
      %p46 = scmp.eq.s32.totalorder %s13, 0
      %p47 = por %p45, %p46
      %p48 = scmp.ne.s32.totalorder %s37, %s40
      %p49 = scmp.eq.s32.totalorder %s18, 1
      %p50 = por %p48, %p49
      %p51 = scmp.ne.s32.totalorder %s40, %s41
      %p52 = scmp.eq.s32.totalorder %s18, 0
      %p53 = por %p51, %p52
      %p54 = scmp.ne.s32.totalorder %s40, %s41
      %p55 = scmp.eq.s32.totalorder %s19, 1
      %p56 = por %p54, %p55
      %p58 = scmp.ne.s32.totalorder %s41, %s57
      %p59 = scmp.eq.s32.totalorder %s19, 0
      %p60 = por %p58, %p59
      %s62 = sadd.s32 %s61, 1
      %p65 = scmp.eq.s32.totalorder %s13, 1
      %p66 = scmp.ne.s32.totalorder %s61, %s63
      %p67 = scmp.eq.s32.totalorder %s13, 0
      %p68 = por %p66, %p67
      %p69 = scmp.ne.s32.totalorder %s61, %s63
      %p70 = scmp.eq.s32.totalorder %s18, 1
      %p71 = por %p69, %p70
      %p72 = scmp.ne.s32.totalorder %s63, %s64
      %p73 = scmp.eq.s32.totalorder %s18, 0
      %p74 = por %p72, %p73
      %p75 = scmp.ne.s32.totalorder %s63, %s64
      %p76 = scmp.eq.s32.totalorder %s19, 1
      %p77 = por %p75, %p76
      %p79 = scmp.ne.s32.totalorder %s64, %s78
      %p80 = scmp.eq.s32.totalorder %s19, 0
      %p81 = por %p79, %p80
      %s83 = sadd.s32 %s82, 1
      %p86 = scmp.eq.s32.totalorder %s13, 1
      %p87 = scmp.ne.s32.totalorder %s82, %s84
      %p88 = scmp.eq.s32.totalorder %s13, 0
      %p89 = por %p87, %p88
      %p90 = scmp.ne.s32.totalorder %s82, %s84
      %p91 = scmp.eq.s32.totalorder %s18, 1
      %p92 = por %p90, %p91
      %p93 = scmp.ne.s32.totalorder %s84, %s85
      %p94 = scmp.eq.s32.totalorder %s18, 0
      %p95 = por %p93, %p94
      %p96 = scmp.ne.s32.totalorder %s84, %s85
      %p97 = scmp.eq.s32.totalorder %s19, 1
      %p98 = por %p96, %p97
      %p100 = scmp.ne.s32.totalorder %s85, %s99
      %p101 = scmp.eq.s32.totalorder %s19, 0
      %p102 = por %p100, %p101
      %s104 = sadd.s32 %s103, 1
      %p107 = scmp.eq.s32.totalorder %s13, 1
      %p108 = scmp.ne.s32.totalorder %s103, %s105
      %p109 = scmp.eq.s32.totalorder %s13, 0
      %p110 = por %p108, %p109
      %p111 = scmp.ne.s32.totalorder %s103, %s105
      %p112 = scmp.eq.s32.totalorder %s18, 1
      %p113 = por %p111, %p112
      %p114 = scmp.ne.s32.totalorder %s105, %s106
      %p115 = scmp.eq.s32.totalorder %s18, 0
      %p116 = por %p114, %p115
      %p117 = scmp.ne.s32.totalorder %s105, %s106
      %p118 = scmp.eq.s32.totalorder %s19, 1
      %p119 = por %p117, %p118
      %p121 = scmp.ne.s32.totalorder %s106, %s120
      %p122 = scmp.eq.s32.totalorder %s19, 0
      %p123 = por %p121, %p122
      %s125 = sadd.s32 %s124, 1
      %p128 = scmp.eq.s32.totalorder %s13, 1
      %p129 = scmp.ne.s32.totalorder %s124, %s126
      %p130 = scmp.eq.s32.totalorder %s13, 0
      %p131 = por %p129, %p130
      %p132 = scmp.ne.s32.totalorder %s124, %s126
      %p133 = scmp.eq.s32.totalorder %s18, 1
      %p134 = por %p132, %p133
      %p135 = scmp.ne.s32.totalorder %s126, %s127
      %p136 = scmp.eq.s32.totalorder %s18, 0
      %p137 = por %p135, %p136
      %p138 = scmp.ne.s32.totalorder %s126, %s127
      %p139 = scmp.eq.s32.totalorder %s19, 1
      %p140 = por %p138, %p139
      %p142 = scmp.ne.s32.totalorder %s127, %s141
      %p143 = scmp.eq.s32.totalorder %s19, 0
      %p144 = por %p142, %p143
      %s145 = ssub.s32 %s21, %s28
      %s146 = ssub.s32 %s20, %s32
      %s147 = sor.u32 %s145, %s146
      %p148 = scmp.eq.s32.totalorder %s147, 0
      %s150 = sadd.s32 %s149, 1
      %s151 = scalar_select %p148, %s149, %s150
      %p154 = pneg %p148
      %p155 = scmp.eq.s32.totalorder %s13, 1
      %p156 = por %p154, %p155
      %p157 = scmp.ne.s32.totalorder %s149, %s152
      %p158 = scmp.eq.s32.totalorder %s13, 0
      %p159 = por %p157, %p158
      %p160 = scmp.ne.s32.totalorder %s149, %s152
      %p161 = scmp.eq.s32.totalorder %s18, 1
      %p162 = por %p160, %p161
      %p163 = scmp.ne.s32.totalorder %s152, %s153
      %p164 = scmp.eq.s32.totalorder %s18, 0
      %p165 = por %p163, %p164
      %p166 = scmp.ne.s32.totalorder %s152, %s153
      %p167 = scmp.eq.s32.totalorder %s19, 1
      %p168 = por %p166, %p167
      %p170 = scmp.ne.s32.totalorder %s153, %s169
      %p171 = scmp.eq.s32.totalorder %s19, 0
      %p172 = por %p170, %p171
      %p173 = scmp.le.s32.totalorder 1, %s13
      %p174 = scmp.lt.s32.totalorder %s13, 3
      %p175 = pnand %p173, %p174
      %p176 = pneg %p175
      // Predicated region
      $region9: #{_lambda_.1} parent=5 // pred_check
        _
      $region10: #{_lambda_.1} parent=5 // pred_check_branch
        %178 = sbr.rel (%p175) target = $region12
      $region11: #{_lambda_.1} parent=5 // pred_region
        %s179 = ssub.s32 %s13, 1
        // Predicated region
        $region13: #{_lambda_.1} parent=11 // pred_check
          %p180 = pneg %p74
        $region14: #{_lambda_.1} parent=11 // pred_check_branch
          %182 = sbr.rel (%p180) target = $region16
        $region15: #{_lambda_.1} parent=11 // pred_region
          %s184 = ssub.s32 768, 768
          %185 = vsyncadd [#allocation4], %s184
          %s186 = sshll.u32 [#allocation3], 4
          %s187 = int_to_ptr.vmem [resolvable:$true] %s186
          %192 = dma.hbm_to_vmem [thread:$0]  %s1, 768, %s187, [#allocation4], 384, 384, 24
        $region16: #{_lambda_.1} parent=11 // pred_fallthru
          _
        // Predicated region
        $region17: #{_lambda_.1} parent=11 // pred_check
          %p193 = pneg %p95
        $region18: #{_lambda_.1} parent=11 // pred_check_branch
          %195 = sbr.rel (%p193) target = $region20
        $region19: #{_lambda_.1} parent=11 // pred_region
          %s197 = ssub.s32 6144, 6144
          %198 = vsyncadd [#allocation6], %s197
          %s199 = sshll.u32 [#allocation5], 4
          %s200 = int_to_ptr.vmem [resolvable:$true] %s199
          %205 = dma.hbm_to_vmem [thread:$0]  %s2, 6144, %s200, [#allocation6], 384, 384, 24
        $region20: #{_lambda_.1} parent=11 // pred_fallthru
          _
        // Predicated region
        $region21: #{_lambda_.1} parent=11 // pred_check
          %p206 = pneg %p116
        $region22: #{_lambda_.1} parent=11 // pred_check_branch
          %208 = sbr.rel (%p206) target = $region24
        $region23: #{_lambda_.1} parent=11 // pred_region
          _
        $region24: #{_lambda_.1} parent=11 // pred_fallthru
          _
        // Predicated region
        $region25: #{_lambda_.1} parent=11 // pred_check
          %p209 = pneg %p137
        $region26: #{_lambda_.1} parent=11 // pred_check_branch
          %211 = sbr.rel (%p209) target = $region28
        $region27: #{_lambda_.1} parent=11 // pred_region
          _
        $region28: #{_lambda_.1} parent=11 // pred_fallthru
          _
      $region12: #{_lambda_.1} parent=5 // pred_fallthru
        _
      %p212 = scmp.lt.s32.totalorder %s13, 2
      // Predicated region
      $region29: #{_lambda_.1} parent=5 // pred_check
        %p213 = pneg %p212
      $region30: #{_lambda_.1} parent=5 // pred_check_branch
        %215 = sbr.rel (%p213) target = $region32
      $region31: #{_lambda_.1} parent=5 // pred_region
        // Predicated region
        $region33: #{_lambda_.1} parent=31 // pred_check
          %p216 = pneg %p47
        $region34: #{_lambda_.1} parent=31 // pred_check_branch
          %218 = sbr.rel (%p216) target = $region36
        $region35: #{_lambda_.1} parent=31 // pred_region
          %s219 = smul.u32 4, %s21
          %p220 = scmp.lt.s32.totalorder %s219, 7
          %s221 = scalar_select %p220, %s219, 7
          %p222 = scmp.lt.s32.totalorder %s20, 0
          %s223 = scalar_select %p222, %s20, 0
          %s224 = sadd.s32 %s223, %s221
          %s225 = smul.addr %s224, 2
          %s226 = scalar_lea.vmem %s0, %s225
          %s227 = smul.u32 4, %s21
        $region36: #{_lambda_.1} parent=31 // pred_fallthru
          _
      $region32: #{_lambda_.1} parent=5 // pred_fallthru
        _
      %p228 = scmp.le.s32.totalorder 1, %s13
      %p229 = scmp.lt.s32.totalorder %s13, 3
      %p230 = pnand %p228, %p229
      %p231 = pneg %p230
      // Predicated region
      $region37: #{_lambda_.1} parent=5 // pred_check
        _
      $region38: #{_lambda_.1} parent=5 // pred_check_branch
        %233 = sbr.rel (%p230) target = $region40
      $region39: #{_lambda_.1} parent=5 // pred_region
        %s234 = ssub.s32 %s13, 1
        // Predicated region
        $region41: #{_lambda_.1} parent=39 // pred_check
          %p235 = pneg %p74
        $region42: #{_lambda_.1} parent=39 // pred_check_branch
          %237 = sbr.rel (%p235) target = $region44
        $region43: #{_lambda_.1} parent=39 // pred_region
          %238 = dma.done [#allocation4], 768
        $region44: #{_lambda_.1} parent=39 // pred_fallthru
          _
        // Predicated region
        $region45: #{_lambda_.1} parent=39 // pred_check
          %p239 = pneg %p95
        $region46: #{_lambda_.1} parent=39 // pred_check_branch
          %241 = sbr.rel (%p239) target = $region48
        $region47: #{_lambda_.1} parent=39 // pred_region
          %242 = dma.done [#allocation6], 6144
        $region48: #{_lambda_.1} parent=39 // pred_fallthru
          _
        %s243 = smul.u32 4, %s23
        %p244 = scmp.lt.s32.totalorder %s243, 7
        %s245 = scalar_select %p244, %s243, 7
        %p246 = scmp.lt.s32.totalorder %s22, 0
        %s247 = scalar_select %p246, %s22, 0
        %s248 = sadd.s32 %s247, %s245
        %s249 = smul.addr %s248, 2
        %s250 = scalar_lea.vmem %s0, %s249
        %p251 = pneg %p53
        %p252 = pneg %p50
        %p253 = pneg %p74
        %p254 = pneg %p71
        %p255 = pneg %p95
        %p256 = pneg %p92
        %p257 = pneg %p116
        %p258 = pneg %p113
        %p259 = pneg %p137
        %p260 = pneg %p134
        %p261 = pneg %p165
        %p262 = pneg %p162
        %s263 = smul.u32 4, %s23
        %p264 = scmp.lt.s32.totalorder %s263, 7
        %s265 = scalar_select %p264, %s263, 7
        %p266 = scmp.lt.s32.totalorder %s22, 0
        %s267 = scalar_select %p266, %s22, 0
        %s268 = sadd.s32 %s267, %s265
        %s269 = smul.addr %s268, 2
        %s270 = scalar_lea.vmem %s5, %s269
        %s271 = smul.u32 4, %s23
        %p272 = scmp.lt.s32.totalorder %s271, 7
        %s273 = scalar_select %p272, %s271, 7
        %p274 = scmp.lt.s32.totalorder %s22, 0
        %s275 = scalar_select %p274, %s22, 0
        %s276 = sadd.s32 %s275, %s273
        %s277 = smul.addr %s276, 2
        %s278 = scalar_lea.vmem %s0, %s277
        %s279 = smul.u32 4, %s23
        %s280 = smul.u32 4, %s23
        %p281 = scmp.lt.s32.totalorder %s280, 7
        %s282 = scalar_select %p281, %s280, 7
        %p283 = scmp.lt.s32.totalorder %s22, 0
        %s284 = scalar_select %p283, %s22, 0
        %s285 = sadd.s32 %s284, %s282
        %s286 = smul.addr %s285, 2
        %s287 = scalar_lea.vmem %s5, %s286
        %s288 = smul.u32 4, %s23
        %p289 = scmp.eq.s32.totalorder %s23, 0
        // Predicated region
        $region49: #{_lambda_.1} parent=39 // pred_check
          %p290 = pneg %p289
        $region50: #{_lambda_.1} parent=39 // pred_check_branch
          %292 = sbr.rel (%p290) target = $region52
        $region51: #{_lambda_.1} parent=39 // pred_region
          %293 = vst [vmem:[#allocation2] sm:$0x3] 0.0
        $region52: #{_lambda_.1} parent=39 // pred_fallthru
          _
        %v294 = vld [vmem:[%s3] sm:$0x7]
        %v295 = vld [vmem:[%s4] sm:$0x1]
        %v296 = vld [vmem:[#allocation2] sm:$0x3]
        %v297 = vld [vmem:[%s278] sm:$0x3]
        %v298 = vld [vmem:[#allocation3] sm:$0xff]
        %v299 = vld [vmem:[#allocation3 + $0x8] sm:$0xff]
        %v300 = vld [vmem:[#allocation3 + $0x10] sm:$0xff]
        %v301 = vld [vmem:[#allocation3 + $0x18] sm:$0xff]
        %v302 = vld [vmem:[#allocation3 + $0x20] sm:$0xff]
        %v303 = vld [vmem:[#allocation3 + $0x28] sm:$0xff]
        %v305 = vlaneseq
        %v306 = vshrl.u32 %v305, 7
        %v307 = vsub.s32 0, %v306
        %v308 = vrot.slane %v294, %v307
        %v309 = vlaneseq
        %v310 = vshrl.u32 %v309, 7
        %v311 = vsub.s32 1, %v310
        %v312 = vrot.slane %v294, %v311
        %v313 = vlaneseq
        %v314 = vshrl.u32 %v313, 7
        %v315 = vsub.s32 2, %v314
        %v316 = vrot.slane %v294, %v315
        %vm320 = vcmask 130048
        %v322 = vsel %vm320, %v297, 0
        %324 = vmatprep.subr.mxu0 %v299
        %325 = vmatpush1.msra.mxu0 %v298
        %326 = vmatprep.subr.mxu0 %v302
        %327 = vmatpush1.msra.mxu0 %v301
        %328 = vmatprep.subr.mxu0 0.0
        %329 = vmatpush1.msra.mxu0 0.0
        %330 = vmatprep.subr.mxu0 0.0
        %331 = vmatpush1.msra.mxu0 0.0
        %332 = vmatprep.subr.mxu0 0.0
        %333 = vmatpush1.msra.mxu0 0.0
        %334 = vmatprep.subr.mxu0 0.0
        %335 = vmatpush1.msra.mxu0 0.0
        %336 = vmatprep.subr.mxu0 0.0
        %337 = vmatpush1.msra.mxu0 0.0
        %338 = vmatprep.subr.mxu0 0.0
        %339 = vmatpush1.msra.mxu0 0.0
        %340 = vmatprep.subr.mxu0 0.0
        %341 = vmatpush1.msra.mxu0 0.0
        %342 = vmatprep.subr.mxu0 0.0
        %343 = vmatpush1.msra.mxu0 0.0
        %344 = vmatprep.subr.mxu0 0.0
        %345 = vmatpush1.msra.mxu0 0.0
        %346 = vmatprep.subr.mxu0 0.0
        %347 = vmatpush1.msra.mxu0 0.0
        %348 = vmatprep.subr.mxu0 0.0
        %349 = vmatpush1.msra.mxu0 0.0
        %350 = vmatprep.subr.mxu0 0.0
        %351 = vmatpush1.msra.mxu0 0.0
        %352 = vmatprep.subr.mxu0 0.0
        %353 = vmatpush1.msra.mxu0 0.0
        %354 = vmatprep.subr.mxu0 0.0
        %355 = vmatpush1.msra.mxu0 0.0
        %356 = vmatprep.subr.mxu0 0.0
        %357 = vmatpush1.msra.mxu0 0.0
        %358 = vmatprep.subr.mxu0 0.0
        %359 = vmatpush1.msra.mxu0 0.0
        %360 = vmatprep.subr.mxu0 0.0
        %361 = vmatpush1.msra.mxu0 0.0
        %362 = vmatprep.subr.mxu0 0.0
        %363 = vmatpush1.msra.mxu0 0.0
        %364 = vmatprep.subr.mxu0 0.0
        %365 = vmatpush1.msra.mxu0 0.0
        %366 = vmatprep.subr.mxu0 0.0
        %367 = vmatpush1.msra.mxu0 0.0
        %368 = vmatprep.subr.mxu0 0.0
        %369 = vmatpush1.msra.mxu0 0.0
        %370 = vmatprep.subr.mxu0 0.0
        %371 = vmatpush1.msra.mxu0 0.0
        %372 = vmatprep.subr.mxu0 0.0
        %373 = vmatpush1.msra.mxu0 0.0
        %374 = vmatprep.subr.mxu0 0.0
        %375 = vmatpush1.msra.mxu0 0.0
        %376 = vmatprep.subr.mxu0 0.0
        %377 = vmatpush1.msra.mxu0 0.0
        %378 = vmatprep.subr.mxu0 0.0
        %379 = vmatpush1.msra.mxu0 0.0
        %380 = vmatprep.subr.mxu0 0.0
        %381 = vmatpush1.msra.mxu0 0.0
        %382 = vmatprep.subr.mxu0 0.0
        %383 = vmatpush1.msra.mxu0 0.0
        %384 = vmatprep.subr.mxu0 0.0
        %385 = vmatpush1.msra.mxu0 0.0
        %386 = vmatprep.subr.mxu0 0.0
        %387 = vmatpush1.msra.mxu0 0.0
        %388 = vmatprep.mubr.f32.mxu0 0.0
        %389 = vmatmul.mubr.f32.gmra.mrb[0].mxu0 %v322
        %v390 = vpop.f32.mrb[0].mxu0
        %v391 = vadd.f32 %v308, %v390
        %v392 = vpop.f32.mrb[0].mxu0
        %v393 = vadd.f32 %v312, %v392
        %394 = vdwg.mxu0
        %395 = vmatprep.subr.mxu0 0.0
        %396 = vmatpush1.msra.mxu0 %v300
        %397 = vmatprep.subr.mxu0 0.0
        %398 = vmatpush1.msra.mxu0 %v303
        %399 = vmatprep.subr.mxu0 0.0
        %400 = vmatpush1.msra.mxu0 0.0
        %401 = vmatprep.subr.mxu0 0.0
        %402 = vmatpush1.msra.mxu0 0.0
        %403 = vmatprep.subr.mxu0 0.0
        %404 = vmatpush1.msra.mxu0 0.0
        %405 = vmatprep.subr.mxu0 0.0
        %406 = vmatpush1.msra.mxu0 0.0
        %407 = vmatprep.subr.mxu0 0.0
        %408 = vmatpush1.msra.mxu0 0.0
        %409 = vmatprep.subr.mxu0 0.0
        %410 = vmatpush1.msra.mxu0 0.0
        %411 = vmatprep.subr.mxu0 0.0
        %412 = vmatpush1.msra.mxu0 0.0
        %413 = vmatprep.subr.mxu0 0.0
        %414 = vmatpush1.msra.mxu0 0.0
        %415 = vmatprep.subr.mxu0 0.0
        %416 = vmatpush1.msra.mxu0 0.0
        %417 = vmatprep.subr.mxu0 0.0
        %418 = vmatpush1.msra.mxu0 0.0
        %419 = vmatprep.subr.mxu0 0.0
        %420 = vmatpush1.msra.mxu0 0.0
        %421 = vmatprep.subr.mxu0 0.0
        %422 = vmatpush1.msra.mxu0 0.0
        %423 = vmatprep.subr.mxu0 0.0
        %424 = vmatpush1.msra.mxu0 0.0
        %425 = vmatprep.subr.mxu0 0.0
        %426 = vmatpush1.msra.mxu0 0.0
        %427 = vmatprep.subr.mxu0 0.0
        %428 = vmatpush1.msra.mxu0 0.0
        %429 = vmatprep.subr.mxu0 0.0
        %430 = vmatpush1.msra.mxu0 0.0
        %431 = vmatprep.subr.mxu0 0.0
        %432 = vmatpush1.msra.mxu0 0.0
        %433 = vmatprep.subr.mxu0 0.0
        %434 = vmatpush1.msra.mxu0 0.0
        %435 = vmatprep.subr.mxu0 0.0
        %436 = vmatpush1.msra.mxu0 0.0
        %437 = vmatprep.subr.mxu0 0.0
        %438 = vmatpush1.msra.mxu0 0.0
        %439 = vmatprep.subr.mxu0 0.0
        %440 = vmatpush1.msra.mxu0 0.0
        %441 = vmatprep.subr.mxu0 0.0
        %442 = vmatpush1.msra.mxu0 0.0
        %443 = vmatprep.subr.mxu0 0.0
        %444 = vmatpush1.msra.mxu0 0.0
        %445 = vmatprep.subr.mxu0 0.0
        %446 = vmatpush1.msra.mxu0 0.0
        %447 = vmatprep.subr.mxu0 0.0
        %448 = vmatpush1.msra.mxu0 0.0
        %449 = vmatprep.subr.mxu0 0.0
        %450 = vmatpush1.msra.mxu0 0.0
        %451 = vmatprep.subr.mxu0 0.0
        %452 = vmatpush1.msra.mxu0 0.0
        %453 = vmatprep.subr.mxu0 0.0
        %454 = vmatpush1.msra.mxu0 0.0
        %455 = vmatprep.subr.mxu0 0.0
        %456 = vmatpush1.msra.mxu0 0.0
        %457 = vmatprep.subr.mxu0 0.0
        %458 = vmatpush1.msra.mxu0 0.0
        %459 = vmatprep.mubr.f32.mxu0 0.0
        %460 = vmatmul.mubr.f32.gmra.mrb[0].mxu0 %v322
        %v461 = vpop.f32.mrb[0].mxu0
        %v462 = vadd.f32 %v316, %v461
        %v463 = vpop.f32.mrb[0].mxu0
        %464 = vdwg.mxu0
        %v465 = vld [vmem:[#allocation5] sm:$0xff]
        %v466 = vld [vmem:[#allocation5 + $0x8] sm:$0xff]
        %v467 = vld [vmem:[#allocation5 + $0x10] sm:$0xff]
        %v468 = vld [vmem:[#allocation5 + $0x18] sm:$0xff]
        %v469 = vld [vmem:[#allocation5 + $0x20] sm:$0xff]
        %v470 = vld [vmem:[#allocation5 + $0x28] sm:$0xff]
        %v471 = vld [vmem:[#allocation5 + $0x30] sm:$0xff]
        %v472 = vld [vmem:[#allocation5 + $0x38] sm:$0xff]
        %v473 = vld [vmem:[#allocation5 + $0x40] sm:$0xff]
        %v474 = vld [vmem:[#allocation5 + $0x48] sm:$0xff]
        %v475 = vld [vmem:[#allocation5 + $0x50] sm:$0xff]
        %v476 = vld [vmem:[#allocation5 + $0x58] sm:$0xff]
        %v477 = vld [vmem:[#allocation5 + $0x60] sm:$0xff]
        %v478 = vld [vmem:[#allocation5 + $0x68] sm:$0xff]
        %v479 = vld [vmem:[#allocation5 + $0x70] sm:$0xff]
        %v480 = vld [vmem:[#allocation5 + $0x78] sm:$0xff]
        %v481 = vld [vmem:[#allocation5 + $0x80] sm:$0xff]
        %v482 = vld [vmem:[#allocation5 + $0x88] sm:$0xff]
        %v483 = vld [vmem:[#allocation5 + $0x90] sm:$0xff]
        %v484 = vld [vmem:[#allocation5 + $0x98] sm:$0xff]
        %v485 = vld [vmem:[#allocation5 + $0xa0] sm:$0xff]
        %v486 = vld [vmem:[#allocation5 + $0xa8] sm:$0xff]
        %v487 = vld [vmem:[#allocation5 + $0xb0] sm:$0xff]
        %v488 = vld [vmem:[#allocation5 + $0xb8] sm:$0xff]
        %v489 = vld [vmem:[#allocation5 + $0xc0] sm:$0xff]
        %v490 = vld [vmem:[#allocation5 + $0xc8] sm:$0xff]
        %v491 = vld [vmem:[#allocation5 + $0xd0] sm:$0xff]
        %v492 = vld [vmem:[#allocation5 + $0xd8] sm:$0xff]
        %v493 = vld [vmem:[#allocation5 + $0xe0] sm:$0xff]
        %v494 = vld [vmem:[#allocation5 + $0xe8] sm:$0xff]
        %v495 = vld [vmem:[#allocation5 + $0xf0] sm:$0xff]
        %v496 = vld [vmem:[#allocation5 + $0xf8] sm:$0xff]
        %v497 = vld [vmem:[#allocation5 + $0x100] sm:$0xff]
        %v498 = vld [vmem:[#allocation5 + $0x108] sm:$0xff]
        %v499 = vld [vmem:[#allocation5 + $0x110] sm:$0xff]
        %v500 = vld [vmem:[#allocation5 + $0x118] sm:$0xff]
        %v501 = vld [vmem:[#allocation5 + $0x120] sm:$0xff]
        %v502 = vld [vmem:[#allocation5 + $0x128] sm:$0xff]
        %v503 = vld [vmem:[#allocation5 + $0x130] sm:$0xff]
        %v504 = vld [vmem:[#allocation5 + $0x138] sm:$0xff]
        %v505 = vld [vmem:[#allocation5 + $0x140] sm:$0xff]
        %v506 = vld [vmem:[#allocation5 + $0x148] sm:$0xff]
        %v507 = vld [vmem:[#allocation5 + $0x150] sm:$0xff]
        %v508 = vld [vmem:[#allocation5 + $0x158] sm:$0xff]
        %v509 = vld [vmem:[#allocation5 + $0x160] sm:$0xff]
        %v510 = vld [vmem:[#allocation5 + $0x168] sm:$0xff]
        %v511 = vld [vmem:[#allocation5 + $0x170] sm:$0xff]
        %v512 = vld [vmem:[#allocation5 + $0x178] sm:$0xff]
        %513 = vmatprep.subr.mxu0 %v466
        %514 = vmatpush1.msra.mxu0 %v465
        %515 = vmatprep.subr.mxu0 %v469
        %516 = vmatpush1.msra.mxu0 %v468
        %517 = vmatprep.subr.mxu0 %v472
        %518 = vmatpush1.msra.mxu0 %v471
        %519 = vmatprep.subr.mxu0 %v475
        %520 = vmatpush1.msra.mxu0 %v474
        %521 = vmatprep.subr.mxu0 %v478
        %522 = vmatpush1.msra.mxu0 %v477
        %523 = vmatprep.subr.mxu0 %v481
        %524 = vmatpush1.msra.mxu0 %v480
        %525 = vmatprep.subr.mxu0 %v484
        %526 = vmatpush1.msra.mxu0 %v483
        %527 = vmatprep.subr.mxu0 %v487
        %528 = vmatpush1.msra.mxu0 %v486
        %529 = vmatprep.subr.mxu0 %v490
        %530 = vmatpush1.msra.mxu0 %v489
        %531 = vmatprep.subr.mxu0 %v493
        %532 = vmatpush1.msra.mxu0 %v492
        %533 = vmatprep.subr.mxu0 %v496
        %534 = vmatpush1.msra.mxu0 %v495
        %535 = vmatprep.subr.mxu0 %v499
        %536 = vmatpush1.msra.mxu0 %v498
        %537 = vmatprep.subr.mxu0 %v502
        %538 = vmatpush1.msra.mxu0 %v501
        %539 = vmatprep.subr.mxu0 %v505
        %540 = vmatpush1.msra.mxu0 %v504
        %541 = vmatprep.subr.mxu0 %v508
        %542 = vmatpush1.msra.mxu0 %v507
        %543 = vmatprep.subr.mxu0 %v511
        %544 = vmatpush1.msra.mxu0 %v510
        %545 = vmatprep.subr.mxu0 0.0
        %546 = vmatpush1.msra.mxu0 0.0
        %547 = vmatprep.subr.mxu0 0.0
        %548 = vmatpush1.msra.mxu0 0.0
        %549 = vmatprep.subr.mxu0 0.0
        %550 = vmatpush1.msra.mxu0 0.0
        %551 = vmatprep.subr.mxu0 0.0
        %552 = vmatpush1.msra.mxu0 0.0
        %553 = vmatprep.subr.mxu0 0.0
        %554 = vmatpush1.msra.mxu0 0.0
        %555 = vmatprep.subr.mxu0 0.0
        %556 = vmatpush1.msra.mxu0 0.0
        %557 = vmatprep.subr.mxu0 0.0
        %558 = vmatpush1.msra.mxu0 0.0
        %559 = vmatprep.subr.mxu0 0.0
        %560 = vmatpush1.msra.mxu0 0.0
        %561 = vmatprep.subr.mxu0 0.0
        %562 = vmatpush1.msra.mxu0 0.0
        %563 = vmatprep.subr.mxu0 0.0
        %564 = vmatpush1.msra.mxu0 0.0
        %565 = vmatprep.subr.mxu0 0.0
        %566 = vmatpush1.msra.mxu0 0.0
        %567 = vmatprep.subr.mxu0 0.0
        %568 = vmatpush1.msra.mxu0 0.0
        %569 = vmatprep.subr.mxu0 0.0
        %570 = vmatpush1.msra.mxu0 0.0
        %571 = vmatprep.subr.mxu0 0.0
        %572 = vmatpush1.msra.mxu0 0.0
        %573 = vmatprep.subr.mxu0 0.0
        %574 = vmatpush1.msra.mxu0 0.0
        %575 = vmatprep.subr.mxu0 0.0
        %576 = vmatpush1.msra.mxu0 0.0
        %577 = vmatprep.mubr.f32.mxu0 0.0
        %578 = vmatmul.mubr.f32.gmra.mrb[0].mxu0 %v296
        %v579 = vpop.f32.mrb[0].mxu0
        %v580 = vadd.f32 0.0, %v579
        %v581 = vpop.f32.mrb[0].mxu0
        %v582 = vadd.f32 0.0, %v581
        %583 = vdwg.mxu0
        %584 = vmatprep.subr.mxu0 0.0
        %585 = vmatpush1.msra.mxu0 %v467
        %586 = vmatprep.subr.mxu0 0.0
        %587 = vmatpush1.msra.mxu0 %v470
        %588 = vmatprep.subr.mxu0 0.0
        %589 = vmatpush1.msra.mxu0 %v473
        %590 = vmatprep.subr.mxu0 0.0
        %591 = vmatpush1.msra.mxu0 %v476
        %592 = vmatprep.subr.mxu0 0.0
        %593 = vmatpush1.msra.mxu0 %v479
        %594 = vmatprep.subr.mxu0 0.0
        %595 = vmatpush1.msra.mxu0 %v482
        %596 = vmatprep.subr.mxu0 0.0
        %597 = vmatpush1.msra.mxu0 %v485
        %598 = vmatprep.subr.mxu0 0.0
        %599 = vmatpush1.msra.mxu0 %v488
        %600 = vmatprep.subr.mxu0 0.0
        %601 = vmatpush1.msra.mxu0 %v491
        %602 = vmatprep.subr.mxu0 0.0
        %603 = vmatpush1.msra.mxu0 %v494
        %604 = vmatprep.subr.mxu0 0.0
        %605 = vmatpush1.msra.mxu0 %v497
        %606 = vmatprep.subr.mxu0 0.0
        %607 = vmatpush1.msra.mxu0 %v500
        %608 = vmatprep.subr.mxu0 0.0
        %609 = vmatpush1.msra.mxu0 %v503
        %610 = vmatprep.subr.mxu0 0.0
        %611 = vmatpush1.msra.mxu0 %v506
        %612 = vmatprep.subr.mxu0 0.0
        %613 = vmatpush1.msra.mxu0 %v509
        %614 = vmatprep.subr.mxu0 0.0
        %615 = vmatpush1.msra.mxu0 %v512
        %616 = vmatprep.subr.mxu0 0.0
        %617 = vmatpush1.msra.mxu0 0.0
        %618 = vmatprep.subr.mxu0 0.0
        %619 = vmatpush1.msra.mxu0 0.0
        %620 = vmatprep.subr.mxu0 0.0
        %621 = vmatpush1.msra.mxu0 0.0
        %622 = vmatprep.subr.mxu0 0.0
        %623 = vmatpush1.msra.mxu0 0.0
        %624 = vmatprep.subr.mxu0 0.0
        %625 = vmatpush1.msra.mxu0 0.0
        %626 = vmatprep.subr.mxu0 0.0
        %627 = vmatpush1.msra.mxu0 0.0
        %628 = vmatprep.subr.mxu0 0.0
        %629 = vmatpush1.msra.mxu0 0.0
        %630 = vmatprep.subr.mxu0 0.0
        %631 = vmatpush1.msra.mxu0 0.0
        %632 = vmatprep.subr.mxu0 0.0
        %633 = vmatpush1.msra.mxu0 0.0
        %634 = vmatprep.subr.mxu0 0.0
        %635 = vmatpush1.msra.mxu0 0.0
        %636 = vmatprep.subr.mxu0 0.0
        %637 = vmatpush1.msra.mxu0 0.0
        %638 = vmatprep.subr.mxu0 0.0
        %639 = vmatpush1.msra.mxu0 0.0
        %640 = vmatprep.subr.mxu0 0.0
        %641 = vmatpush1.msra.mxu0 0.0
        %642 = vmatprep.subr.mxu0 0.0
        %643 = vmatpush1.msra.mxu0 0.0
        %644 = vmatprep.subr.mxu0 0.0
        %645 = vmatpush1.msra.mxu0 0.0
        %646 = vmatprep.subr.mxu0 0.0
        %647 = vmatpush1.msra.mxu0 0.0
        %648 = vmatprep.mubr.f32.mxu0 0.0
        %649 = vmatmul.mubr.f32.gmra.mrb[0].mxu0 %v296
        %v650 = vpop.f32.mrb[0].mxu0
        %v651 = vadd.f32 0.0, %v650
        %v652 = vpop.f32.mrb[0].mxu0
        %653 = vdwg.mxu0
        %v654 = vadd.f32 %v391, %v580
        %v655 = vadd.f32 %v393, %v582
        %v656 = vxor.u32 %v654, 2147483648
        %v657 = vxor.u32 %v655, 2147483648
        %v658 = vmul.f32 %v656, 1.442695
        %v659 = vpow.pop %v658
        %v660 = vmul.f32 %v657, 1.442695
        %v661 = vpow.pop %v660
        %v662 = vadd.f32 %v659, 1.0
        %v663 = vadd.f32 %v661, 1.0
        %v664 = vrcp.pop %v662
        %v665 = vmul.f32 1.0, %v664
        %v666 = vrcp.pop %v663
        %v667 = vmul.f32 1.0, %v666
        %v669 = vlaneseq
        %v670 = vshrl.u32 %v669, 7
        %v671 = vsub.s32 0, %v670
        %v672 = vrot.slane %v295, %v671
        %v674 = vadd.f32 %v651, %v672
        %v675 = vmul.f32 %v665, %v674
        %v676 = vadd.f32 %v462, %v675
        %v677 = vtanh.pop %v676
        %v678 = vsub.f32 %v296, %v677
        %v679 = vmul.f32 %v667, %v678
        %v680 = vadd.f32 %v677, %v679
        %681 = vst [vmem:[%s287] sm:$0x3] %v680
        %s682 = scalar_lea.vmem %s278, 2
        %v683 = vld [vmem:[%s682] sm:$0x3]
        %v684 = vld [vmem:[#allocation3] sm:$0xff]
        %v685 = vld [vmem:[#allocation3 + $0x8] sm:$0xff]
        %v686 = vld [vmem:[#allocation3 + $0x10] sm:$0xff]
        %v687 = vld [vmem:[#allocation3 + $0x18] sm:$0xff]
        %v688 = vld [vmem:[#allocation3 + $0x20] sm:$0xff]
        %v689 = vld [vmem:[#allocation3 + $0x28] sm:$0xff]
        %v691 = vsel %vm320, %v683, 0
        %693 = vmatprep.subr.mxu0 %v685
        %694 = vmatpush1.msra.mxu0 %v684
        %695 = vmatprep.subr.mxu0 %v688
        %696 = vmatpush1.msra.mxu0 %v687
        %697 = vmatprep.subr.mxu0 0.0
        %698 = vmatpush1.msra.mxu0 0.0
        %699 = vmatprep.subr.mxu0 0.0
        %700 = vmatpush1.msra.mxu0 0.0
        %701 = vmatprep.subr.mxu0 0.0
        %702 = vmatpush1.msra.mxu0 0.0
        %703 = vmatprep.subr.mxu0 0.0
        %704 = vmatpush1.msra.mxu0 0.0
        %705 = vmatprep.subr.mxu0 0.0
        %706 = vmatpush1.msra.mxu0 0.0
        %707 = vmatprep.subr.mxu0 0.0
        %708 = vmatpush1.msra.mxu0 0.0
        %709 = vmatprep.subr.mxu0 0.0
        %710 = vmatpush1.msra.mxu0 0.0
        %711 = vmatprep.subr.mxu0 0.0
        %712 = vmatpush1.msra.mxu0 0.0
        %713 = vmatprep.subr.mxu0 0.0
        %714 = vmatpush1.msra.mxu0 0.0
        %715 = vmatprep.subr.mxu0 0.0
        %716 = vmatpush1.msra.mxu0 0.0
        %717 = vmatprep.subr.mxu0 0.0
        %718 = vmatpush1.msra.mxu0 0.0
        %719 = vmatprep.subr.mxu0 0.0
        %720 = vmatpush1.msra.mxu0 0.0
        %721 = vmatprep.subr.mxu0 0.0
        %722 = vmatpush1.msra.mxu0 0.0
        %723 = vmatprep.subr.mxu0 0.0
        %724 = vmatpush1.msra.mxu0 0.0
        %725 = vmatprep.subr.mxu0 0.0
        %726 = vmatpush1.msra.mxu0 0.0
        %727 = vmatprep.subr.mxu0 0.0
        %728 = vmatpush1.msra.mxu0 0.0
        %729 = vmatprep.subr.mxu0 0.0
        %730 = vmatpush1.msra.mxu0 0.0
        %731 = vmatprep.subr.mxu0 0.0
        %732 = vmatpush1.msra.mxu0 0.0
        %733 = vmatprep.subr.mxu0 0.0
        %734 = vmatpush1.msra.mxu0 0.0
        %735 = vmatprep.subr.mxu0 0.0
        %736 = vmatpush1.msra.mxu0 0.0
        %737 = vmatprep.subr.mxu0 0.0
        %738 = vmatpush1.msra.mxu0 0.0
        %739 = vmatprep.subr.mxu0 0.0
        %740 = vmatpush1.msra.mxu0 0.0
        %741 = vmatprep.subr.mxu0 0.0
        %742 = vmatpush1.msra.mxu0 0.0
        %743 = vmatprep.subr.mxu0 0.0
        %744 = vmatpush1.msra.mxu0 0.0
        %745 = vmatprep.subr.mxu0 0.0
        %746 = vmatpush1.msra.mxu0 0.0
        %747 = vmatprep.subr.mxu0 0.0
        %748 = vmatpush1.msra.mxu0 0.0
        %749 = vmatprep.subr.mxu0 0.0
        %750 = vmatpush1.msra.mxu0 0.0
        %751 = vmatprep.subr.mxu0 0.0
        %752 = vmatpush1.msra.mxu0 0.0
        %753 = vmatprep.subr.mxu0 0.0
        %754 = vmatpush1.msra.mxu0 0.0
        %755 = vmatprep.subr.mxu0 0.0
        %756 = vmatpush1.msra.mxu0 0.0
        %757 = vmatprep.mubr.f32.mxu0 0.0
        %758 = vmatmul.mubr.f32.gmra.mrb[0].mxu0 %v691
        %v759 = vpop.f32.mrb[0].mxu0
        %v760 = vadd.f32 %v308, %v759
        %v761 = vpop.f32.mrb[0].mxu0
        %v762 = vadd.f32 %v312, %v761
        %763 = vdwg.mxu0
        %764 = vmatprep.subr.mxu0 0.0
        %765 = vmatpush1.msra.mxu0 %v686
        %766 = vmatprep.subr.mxu0 0.0
        %767 = vmatpush1.msra.mxu0 %v689
        %768 = vmatprep.subr.mxu0 0.0
        %769 = vmatpush1.msra.mxu0 0.0
        %770 = vmatprep.subr.mxu0 0.0
        %771 = vmatpush1.msra.mxu0 0.0
        %772 = vmatprep.subr.mxu0 0.0
        %773 = vmatpush1.msra.mxu0 0.0
        %774 = vmatprep.subr.mxu0 0.0
        %775 = vmatpush1.msra.mxu0 0.0
        %776 = vmatprep.subr.mxu0 0.0
        %777 = vmatpush1.msra.mxu0 0.0
        %778 = vmatprep.subr.mxu0 0.0
        %779 = vmatpush1.msra.mxu0 0.0
        %780 = vmatprep.subr.mxu0 0.0
        %781 = vmatpush1.msra.mxu0 0.0
        %782 = vmatprep.subr.mxu0 0.0
        %783 = vmatpush1.msra.mxu0 0.0
        %784 = vmatprep.subr.mxu0 0.0
        %785 = vmatpush1.msra.mxu0 0.0
        %786 = vmatprep.subr.mxu0 0.0
        %787 = vmatpush1.msra.mxu0 0.0
        %788 = vmatprep.subr.mxu0 0.0
        %789 = vmatpush1.msra.mxu0 0.0
        %790 = vmatprep.subr.mxu0 0.0
        %791 = vmatpush1.msra.mxu0 0.0
        %792 = vmatprep.subr.mxu0 0.0
        %793 = vmatpush1.msra.mxu0 0.0
        %794 = vmatprep.subr.mxu0 0.0
        %795 = vmatpush1.msra.mxu0 0.0
        %796 = vmatprep.subr.mxu0 0.0
        %797 = vmatpush1.msra.mxu0 0.0
        %798 = vmatprep.subr.mxu0 0.0
        %799 = vmatpush1.msra.mxu0 0.0
        %800 = vmatprep.subr.mxu0 0.0
        %801 = vmatpush1.msra.mxu0 0.0
        %802 = vmatprep.subr.mxu0 0.0
        %803 = vmatpush1.msra.mxu0 0.0
        %804 = vmatprep.subr.mxu0 0.0
        %805 = vmatpush1.msra.mxu0 0.0
        %806 = vmatprep.subr.mxu0 0.0
        %807 = vmatpush1.msra.mxu0 0.0
        %808 = vmatprep.subr.mxu0 0.0
        %809 = vmatpush1.msra.mxu0 0.0
        %810 = vmatprep.subr.mxu0 0.0
        %811 = vmatpush1.msra.mxu0 0.0
        %812 = vmatprep.subr.mxu0 0.0
        %813 = vmatpush1.msra.mxu0 0.0
        %814 = vmatprep.subr.mxu0 0.0
        %815 = vmatpush1.msra.mxu0 0.0
        %816 = vmatprep.subr.mxu0 0.0
        %817 = vmatpush1.msra.mxu0 0.0
        %818 = vmatprep.subr.mxu0 0.0
        %819 = vmatpush1.msra.mxu0 0.0
        %820 = vmatprep.subr.mxu0 0.0
        %821 = vmatpush1.msra.mxu0 0.0
        %822 = vmatprep.subr.mxu0 0.0
        %823 = vmatpush1.msra.mxu0 0.0
        %824 = vmatprep.subr.mxu0 0.0
        %825 = vmatpush1.msra.mxu0 0.0
        %826 = vmatprep.subr.mxu0 0.0
        %827 = vmatpush1.msra.mxu0 0.0
        %828 = vmatprep.mubr.f32.mxu0 0.0
        %829 = vmatmul.mubr.f32.gmra.mrb[0].mxu0 %v691
        %v830 = vpop.f32.mrb[0].mxu0
        %v831 = vadd.f32 %v316, %v830
        %v832 = vpop.f32.mrb[0].mxu0
        %833 = vdwg.mxu0
        %v834 = vld [vmem:[#allocation5] sm:$0xff]
        %v835 = vld [vmem:[#allocation5 + $0x8] sm:$0xff]
        %v836 = vld [vmem:[#allocation5 + $0x10] sm:$0xff]
        %v837 = vld [vmem:[#allocation5 + $0x18] sm:$0xff]
        %v838 = vld [vmem:[#allocation5 + $0x20] sm:$0xff]
        %v839 = vld [vmem:[#allocation5 + $0x28] sm:$0xff]
        %v840 = vld [vmem:[#allocation5 + $0x30] sm:$0xff]
        %v841 = vld [vmem:[#allocation5 + $0x38] sm:$0xff]
        %v842 = vld [vmem:[#allocation5 + $0x40] sm:$0xff]
        %v843 = vld [vmem:[#allocation5 + $0x48] sm:$0xff]
        %v844 = vld [vmem:[#allocation5 + $0x50] sm:$0xff]
        %v845 = vld [vmem:[#allocation5 + $0x58] sm:$0xff]
        %v846 = vld [vmem:[#allocation5 + $0x60] sm:$0xff]
        %v847 = vld [vmem:[#allocation5 + $0x68] sm:$0xff]
        %v848 = vld [vmem:[#allocation5 + $0x70] sm:$0xff]
        %v849 = vld [vmem:[#allocation5 + $0x78] sm:$0xff]
        %v850 = vld [vmem:[#allocation5 + $0x80] sm:$0xff]
        %v851 = vld [vmem:[#allocation5 + $0x88] sm:$0xff]
        %v852 = vld [vmem:[#allocation5 + $0x90] sm:$0xff]
        %v853 = vld [vmem:[#allocation5 + $0x98] sm:$0xff]
        %v854 = vld [vmem:[#allocation5 + $0xa0] sm:$0xff]
        %v855 = vld [vmem:[#allocation5 + $0xa8] sm:$0xff]
        %v856 = vld [vmem:[#allocation5 + $0xb0] sm:$0xff]
        %v857 = vld [vmem:[#allocation5 + $0xb8] sm:$0xff]
        %v858 = vld [vmem:[#allocation5 + $0xc0] sm:$0xff]
        %v859 = vld [vmem:[#allocation5 + $0xc8] sm:$0xff]
        %v860 = vld [vmem:[#allocation5 + $0xd0] sm:$0xff]
        %v861 = vld [vmem:[#allocation5 + $0xd8] sm:$0xff]
        %v862 = vld [vmem:[#allocation5 + $0xe0] sm:$0xff]
        %v863 = vld [vmem:[#allocation5 + $0xe8] sm:$0xff]
        %v864 = vld [vmem:[#allocation5 + $0xf0] sm:$0xff]
        %v865 = vld [vmem:[#allocation5 + $0xf8] sm:$0xff]
        %v866 = vld [vmem:[#allocation5 + $0x100] sm:$0xff]
        %v867 = vld [vmem:[#allocation5 + $0x108] sm:$0xff]
        %v868 = vld [vmem:[#allocation5 + $0x110] sm:$0xff]
        %v869 = vld [vmem:[#allocation5 + $0x118] sm:$0xff]
        %v870 = vld [vmem:[#allocation5 + $0x120] sm:$0xff]
        %v871 = vld [vmem:[#allocation5 + $0x128] sm:$0xff]
        %v872 = vld [vmem:[#allocation5 + $0x130] sm:$0xff]
        %v873 = vld [vmem:[#allocation5 + $0x138] sm:$0xff]
        %v874 = vld [vmem:[#allocation5 + $0x140] sm:$0xff]
        %v875 = vld [vmem:[#allocation5 + $0x148] sm:$0xff]
        %v876 = vld [vmem:[#allocation5 + $0x150] sm:$0xff]
        %v877 = vld [vmem:[#allocation5 + $0x158] sm:$0xff]
        %v878 = vld [vmem:[#allocation5 + $0x160] sm:$0xff]
        %v879 = vld [vmem:[#allocation5 + $0x168] sm:$0xff]
        %v880 = vld [vmem:[#allocation5 + $0x170] sm:$0xff]
        %v881 = vld [vmem:[#allocation5 + $0x178] sm:$0xff]
        %882 = vmatprep.subr.mxu0 %v835
        %883 = vmatpush1.msra.mxu0 %v834
        %884 = vmatprep.subr.mxu0 %v838
        %885 = vmatpush1.msra.mxu0 %v837
        %886 = vmatprep.subr.mxu0 %v841
        %887 = vmatpush1.msra.mxu0 %v840
        %888 = vmatprep.subr.mxu0 %v844
        %889 = vmatpush1.msra.mxu0 %v843
        %890 = vmatprep.subr.mxu0 %v847
        %891 = vmatpush1.msra.mxu0 %v846
        %892 = vmatprep.subr.mxu0 %v850
        %893 = vmatpush1.msra.mxu0 %v849
        %894 = vmatprep.subr.mxu0 %v853
        %895 = vmatpush1.msra.mxu0 %v852
        %896 = vmatprep.subr.mxu0 %v856
        %897 = vmatpush1.msra.mxu0 %v855
        %898 = vmatprep.subr.mxu0 %v859
        %899 = vmatpush1.msra.mxu0 %v858
        %900 = vmatprep.subr.mxu0 %v862
        %901 = vmatpush1.msra.mxu0 %v861
        %902 = vmatprep.subr.mxu0 %v865
        %903 = vmatpush1.msra.mxu0 %v864
        %904 = vmatprep.subr.mxu0 %v868
        %905 = vmatpush1.msra.mxu0 %v867
        %906 = vmatprep.subr.mxu0 %v871
        %907 = vmatpush1.msra.mxu0 %v870
        %908 = vmatprep.subr.mxu0 %v874
        %909 = vmatpush1.msra.mxu0 %v873
        %910 = vmatprep.subr.mxu0 %v877
        %911 = vmatpush1.msra.mxu0 %v876
        %912 = vmatprep.subr.mxu0 %v880
        %913 = vmatpush1.msra.mxu0 %v879
        %914 = vmatprep.subr.mxu0 0.0
        %915 = vmatpush1.msra.mxu0 0.0
        %916 = vmatprep.subr.mxu0 0.0
        %917 = vmatpush1.msra.mxu0 0.0
        %918 = vmatprep.subr.mxu0 0.0
        %919 = vmatpush1.msra.mxu0 0.0
        %920 = vmatprep.subr.mxu0 0.0
        %921 = vmatpush1.msra.mxu0 0.0
        %922 = vmatprep.subr.mxu0 0.0
        %923 = vmatpush1.msra.mxu0 0.0
        %924 = vmatprep.subr.mxu0 0.0
        %925 = vmatpush1.msra.mxu0 0.0
        %926 = vmatprep.subr.mxu0 0.0
        %927 = vmatpush1.msra.mxu0 0.0
        %928 = vmatprep.subr.mxu0 0.0
        %929 = vmatpush1.msra.mxu0 0.0
        %930 = vmatprep.subr.mxu0 0.0
        %931 = vmatpush1.msra.mxu0 0.0
        %932 = vmatprep.subr.mxu0 0.0
        %933 = vmatpush1.msra.mxu0 0.0
        %934 = vmatprep.subr.mxu0 0.0
        %935 = vmatpush1.msra.mxu0 0.0
        %936 = vmatprep.subr.mxu0 0.0
        %937 = vmatpush1.msra.mxu0 0.0
        %938 = vmatprep.subr.mxu0 0.0
        %939 = vmatpush1.msra.mxu0 0.0
        %940 = vmatprep.subr.mxu0 0.0
        %941 = vmatpush1.msra.mxu0 0.0
        %942 = vmatprep.subr.mxu0 0.0
        %943 = vmatpush1.msra.mxu0 0.0
        %944 = vmatprep.subr.mxu0 0.0
        %945 = vmatpush1.msra.mxu0 0.0
        %946 = vmatprep.mubr.f32.mxu0 0.0
        %947 = vmatmul.mubr.f32.gmra.mrb[0].mxu0 %v680
        %v948 = vpop.f32.mrb[0].mxu0
        %v949 = vadd.f32 0.0, %v948
        %v950 = vpop.f32.mrb[0].mxu0
        %v951 = vadd.f32 0.0, %v950
        %952 = vdwg.mxu0
        %953 = vmatprep.subr.mxu0 0.0
        %954 = vmatpush1.msra.mxu0 %v836
        %955 = vmatprep.subr.mxu0 0.0
        %956 = vmatpush1.msra.mxu0 %v839
        %957 = vmatprep.subr.mxu0 0.0
        %958 = vmatpush1.msra.mxu0 %v842
        %959 = vmatprep.subr.mxu0 0.0
        %960 = vmatpush1.msra.mxu0 %v845
        %961 = vmatprep.subr.mxu0 0.0
        %962 = vmatpush1.msra.mxu0 %v848
        %963 = vmatprep.subr.mxu0 0.0
        %964 = vmatpush1.msra.mxu0 %v851
        %965 = vmatprep.subr.mxu0 0.0
        %966 = vmatpush1.msra.mxu0 %v854
        %967 = vmatprep.subr.mxu0 0.0
        %968 = vmatpush1.msra.mxu0 %v857
        %969 = vmatprep.subr.mxu0 0.0
        %970 = vmatpush1.msra.mxu0 %v860
        %971 = vmatprep.subr.mxu0 0.0
        %972 = vmatpush1.msra.mxu0 %v863
        %973 = vmatprep.subr.mxu0 0.0
        %974 = vmatpush1.msra.mxu0 %v866
        %975 = vmatprep.subr.mxu0 0.0
        %976 = vmatpush1.msra.mxu0 %v869
        %977 = vmatprep.subr.mxu0 0.0
        %978 = vmatpush1.msra.mxu0 %v872
        %979 = vmatprep.subr.mxu0 0.0
        %980 = vmatpush1.msra.mxu0 %v875
        %981 = vmatprep.subr.mxu0 0.0
        %982 = vmatpush1.msra.mxu0 %v878
        %983 = vmatprep.subr.mxu0 0.0
        %984 = vmatpush1.msra.mxu0 %v881
        %985 = vmatprep.subr.mxu0 0.0
        %986 = vmatpush1.msra.mxu0 0.0
        %987 = vmatprep.subr.mxu0 0.0
        %988 = vmatpush1.msra.mxu0 0.0
        %989 = vmatprep.subr.mxu0 0.0
        %990 = vmatpush1.msra.mxu0 0.0
        %991 = vmatprep.subr.mxu0 0.0
        %992 = vmatpush1.msra.mxu0 0.0
        %993 = vmatprep.subr.mxu0 0.0
        %994 = vmatpush1.msra.mxu0 0.0
        %995 = vmatprep.subr.mxu0 0.0
        %996 = vmatpush1.msra.mxu0 0.0
        %997 = vmatprep.subr.mxu0 0.0
        %998 = vmatpush1.msra.mxu0 0.0
        %999 = vmatprep.subr.mxu0 0.0
        %1000 = vmatpush1.msra.mxu0 0.0
        %1001 = vmatprep.subr.mxu0 0.0
        %1002 = vmatpush1.msra.mxu0 0.0
        %1003 = vmatprep.subr.mxu0 0.0
        %1004 = vmatpush1.msra.mxu0 0.0
        %1005 = vmatprep.subr.mxu0 0.0
        %1006 = vmatpush1.msra.mxu0 0.0
        %1007 = vmatprep.subr.mxu0 0.0
        %1008 = vmatpush1.msra.mxu0 0.0
        %1009 = vmatprep.subr.mxu0 0.0
        %1010 = vmatpush1.msra.mxu0 0.0
        %1011 = vmatprep.subr.mxu0 0.0
        %1012 = vmatpush1.msra.mxu0 0.0
        %1013 = vmatprep.subr.mxu0 0.0
        %1014 = vmatpush1.msra.mxu0 0.0
        %1015 = vmatprep.subr.mxu0 0.0
        %1016 = vmatpush1.msra.mxu0 0.0
        %1017 = vmatprep.mubr.f32.mxu0 0.0
        %1018 = vmatmul.mubr.f32.gmra.mrb[0].mxu0 %v680
        %v1019 = vpop.f32.mrb[0].mxu0
        %v1020 = vadd.f32 0.0, %v1019
        %v1021 = vpop.f32.mrb[0].mxu0
        %1022 = vdwg.mxu0
        %v1023 = vadd.f32 %v760, %v949
        %v1024 = vadd.f32 %v762, %v951
        %v1025 = vxor.u32 %v1023, 2147483648
        %v1026 = vxor.u32 %v1024, 2147483648
        %v1027 = vmul.f32 %v1025, 1.442695
        %v1028 = vpow.pop %v1027
        %v1029 = vmul.f32 %v1026, 1.442695
        %v1030 = vpow.pop %v1029
        %v1031 = vadd.f32 %v1028, 1.0
        %v1032 = vadd.f32 %v1030, 1.0
        %v1033 = vrcp.pop %v1031
        %v1034 = vmul.f32 1.0, %v1033
        %v1035 = vrcp.pop %v1032
        %v1036 = vmul.f32 1.0, %v1035
        %v1037 = vadd.f32 %v1020, %v672
        %v1038 = vmul.f32 %v1034, %v1037
        %v1039 = vadd.f32 %v831, %v1038
        %v1040 = vtanh.pop %v1039
        %v1041 = vsub.f32 %v680, %v1040
        %v1042 = vmul.f32 %v1036, %v1041
        %v1043 = vadd.f32 %v1040, %v1042
        %s1044 = scalar_lea.vmem %s287, 2
        %1045 = vst [vmem:[%s1044] sm:$0x3] %v1043
        %s1046 = scalar_lea.vmem %s278, 4
        %v1047 = vld [vmem:[%s1046] sm:$0x3]
        %v1048 = vld [vmem:[#allocation3] sm:$0xff]
        %v1049 = vld [vmem:[#allocation3 + $0x8] sm:$0xff]
        %v1050 = vld [vmem:[#allocation3 + $0x10] sm:$0xff]
        %v1051 = vld [vmem:[#allocation3 + $0x18] sm:$0xff]
        %v1052 = vld [vmem:[#allocation3 + $0x20] sm:$0xff]
        %v1053 = vld [vmem:[#allocation3 + $0x28] sm:$0xff]
        %v1055 = vsel %vm320, %v1047, 0
        %1057 = vmatprep.subr.mxu0 %v1049
        %1058 = vmatpush1.msra.mxu0 %v1048
        %1059 = vmatprep.subr.mxu0 %v1052
        %1060 = vmatpush1.msra.mxu0 %v1051
        %1061 = vmatprep.subr.mxu0 0.0
        %1062 = vmatpush1.msra.mxu0 0.0
        %1063 = vmatprep.subr.mxu0 0.0
        %1064 = vmatpush1.msra.mxu0 0.0
        %1065 = vmatprep.subr.mxu0 0.0
        %1066 = vmatpush1.msra.mxu0 0.0
        %1067 = vmatprep.subr.mxu0 0.0
        %1068 = vmatpush1.msra.mxu0 0.0
        %1069 = vmatprep.subr.mxu0 0.0
        %1070 = vmatpush1.msra.mxu0 0.0
        %1071 = vmatprep.subr.mxu0 0.0
        %1072 = vmatpush1.msra.mxu0 0.0
        %1073 = vmatprep.subr.mxu0 0.0
        %1074 = vmatpush1.msra.mxu0 0.0
        %1075 = vmatprep.subr.mxu0 0.0
        %1076 = vmatpush1.msra.mxu0 0.0
        %1077 = vmatprep.subr.mxu0 0.0
        %1078 = vmatpush1.msra.mxu0 0.0
        %1079 = vmatprep.subr.mxu0 0.0
        %1080 = vmatpush1.msra.mxu0 0.0
        %1081 = vmatprep.subr.mxu0 0.0
        %1082 = vmatpush1.msra.mxu0 0.0
        %1083 = vmatprep.subr.mxu0 0.0
        %1084 = vmatpush1.msra.mxu0 0.0
        %1085 = vmatprep.subr.mxu0 0.0
        %1086 = vmatpush1.msra.mxu0 0.0
        %1087 = vmatprep.subr.mxu0 0.0
        %1088 = vmatpush1.msra.mxu0 0.0
        %1089 = vmatprep.subr.mxu0 0.0
        %1090 = vmatpush1.msra.mxu0 0.0
        %1091 = vmatprep.subr.mxu0 0.0
        %1092 = vmatpush1.msra.mxu0 0.0
        %1093 = vmatprep.subr.mxu0 0.0
        %1094 = vmatpush1.msra.mxu0 0.0
        %1095 = vmatprep.subr.mxu0 0.0
        %1096 = vmatpush1.msra.mxu0 0.0
        %1097 = vmatprep.subr.mxu0 0.0
        %1098 = vmatpush1.msra.mxu0 0.0
        %1099 = vmatprep.subr.mxu0 0.0
        %1100 = vmatpush1.msra.mxu0 0.0
        %1101 = vmatprep.subr.mxu0 0.0
        %1102 = vmatpush1.msra.mxu0 0.0
        %1103 = vmatprep.subr.mxu0 0.0
        %1104 = vmatpush1.msra.mxu0 0.0
        %1105 = vmatprep.subr.mxu0 0.0
        %1106 = vmatpush1.msra.mxu0 0.0
        %1107 = vmatprep.subr.mxu0 0.0
        %1108 = vmatpush1.msra.mxu0 0.0
        %1109 = vmatprep.subr.mxu0 0.0
        %1110 = vmatpush1.msra.mxu0 0.0
        %1111 = vmatprep.subr.mxu0 0.0
        %1112 = vmatpush1.msra.mxu0 0.0
        %1113 = vmatprep.subr.mxu0 0.0
        %1114 = vmatpush1.msra.mxu0 0.0
        %1115 = vmatprep.subr.mxu0 0.0
        %1116 = vmatpush1.msra.mxu0 0.0
        %1117 = vmatprep.subr.mxu0 0.0
        %1118 = vmatpush1.msra.mxu0 0.0
        %1119 = vmatprep.subr.mxu0 0.0
        %1120 = vmatpush1.msra.mxu0 0.0
        %1121 = vmatprep.mubr.f32.mxu0 0.0
        %1122 = vmatmul.mubr.f32.gmra.mrb[0].mxu0 %v1055
        %v1123 = vpop.f32.mrb[0].mxu0
        %v1124 = vadd.f32 %v308, %v1123
        %v1125 = vpop.f32.mrb[0].mxu0
        %v1126 = vadd.f32 %v312, %v1125
        %1127 = vdwg.mxu0
        %1128 = vmatprep.subr.mxu0 0.0
        %1129 = vmatpush1.msra.mxu0 %v1050
        %1130 = vmatprep.subr.mxu0 0.0
        %1131 = vmatpush1.msra.mxu0 %v1053
        %1132 = vmatprep.subr.mxu0 0.0
        %1133 = vmatpush1.msra.mxu0 0.0
        %1134 = vmatprep.subr.mxu0 0.0
        %1135 = vmatpush1.msra.mxu0 0.0
        %1136 = vmatprep.subr.mxu0 0.0
        %1137 = vmatpush1.msra.mxu0 0.0
        %1138 = vmatprep.subr.mxu0 0.0
        %1139 = vmatpush1.msra.mxu0 0.0
        %1140 = vmatprep.subr.mxu0 0.0
        %1141 = vmatpush1.msra.mxu0 0.0
        %1142 = vmatprep.subr.mxu0 0.0
        %1143 = vmatpush1.msra.mxu0 0.0
        %1144 = vmatprep.subr.mxu0 0.0
        %1145 = vmatpush1.msra.mxu0 0.0
        %1146 = vmatprep.subr.mxu0 0.0
        %1147 = vmatpush1.msra.mxu0 0.0
        %1148 = vmatprep.subr.mxu0 0.0
        %1149 = vmatpush1.msra.mxu0 0.0
        %1150 = vmatprep.subr.mxu0 0.0
        %1151 = vmatpush1.msra.mxu0 0.0
        %1152 = vmatprep.subr.mxu0 0.0
        %1153 = vmatpush1.msra.mxu0 0.0
        %1154 = vmatprep.subr.mxu0 0.0
        %1155 = vmatpush1.msra.mxu0 0.0
        %1156 = vmatprep.subr.mxu0 0.0
        %1157 = vmatpush1.msra.mxu0 0.0
        %1158 = vmatprep.subr.mxu0 0.0
        %1159 = vmatpush1.msra.mxu0 0.0
        %1160 = vmatprep.subr.mxu0 0.0
        %1161 = vmatpush1.msra.mxu0 0.0
        %1162 = vmatprep.subr.mxu0 0.0
        %1163 = vmatpush1.msra.mxu0 0.0
        %1164 = vmatprep.subr.mxu0 0.0
        %1165 = vmatpush1.msra.mxu0 0.0
        %1166 = vmatprep.subr.mxu0 0.0
        %1167 = vmatpush1.msra.mxu0 0.0
        %1168 = vmatprep.subr.mxu0 0.0
        %1169 = vmatpush1.msra.mxu0 0.0
        %1170 = vmatprep.subr.mxu0 0.0
        %1171 = vmatpush1.msra.mxu0 0.0
        %1172 = vmatprep.subr.mxu0 0.0
        %1173 = vmatpush1.msra.mxu0 0.0
        %1174 = vmatprep.subr.mxu0 0.0
        %1175 = vmatpush1.msra.mxu0 0.0
        %1176 = vmatprep.subr.mxu0 0.0
        %1177 = vmatpush1.msra.mxu0 0.0
        %1178 = vmatprep.subr.mxu0 0.0
        %1179 = vmatpush1.msra.mxu0 0.0
        %1180 = vmatprep.subr.mxu0 0.0
        %1181 = vmatpush1.msra.mxu0 0.0
        %1182 = vmatprep.subr.mxu0 0.0
        %1183 = vmatpush1.msra.mxu0 0.0
        %1184 = vmatprep.subr.mxu0 0.0
        %1185 = vmatpush1.msra.mxu0 0.0
        %1186 = vmatprep.subr.mxu0 0.0
        %1187 = vmatpush1.msra.mxu0 0.0
        %1188 = vmatprep.subr.mxu0 0.0
        %1189 = vmatpush1.msra.mxu0 0.0
        %1190 = vmatprep.subr.mxu0 0.0
        %1191 = vmatpush1.msra.mxu0 0.0
        %1192 = vmatprep.mubr.f32.mxu0 0.0
        %1193 = vmatmul.mubr.f32.gmra.mrb[0].mxu0 %v1055
        %v1194 = vpop.f32.mrb[0].mxu0
        %v1195 = vadd.f32 %v316, %v1194
        %v1196 = vpop.f32.mrb[0].mxu0
        %1197 = vdwg.mxu0
        %v1198 = vld [vmem:[#allocation5] sm:$0xff]
        %v1199 = vld [vmem:[#allocation5 + $0x8] sm:$0xff]
        %v1200 = vld [vmem:[#allocation5 + $0x10] sm:$0xff]
        %v1201 = vld [vmem:[#allocation5 + $0x18] sm:$0xff]
        %v1202 = vld [vmem:[#allocation5 + $0x20] sm:$0xff]
        %v1203 = vld [vmem:[#allocation5 + $0x28] sm:$0xff]
        %v1204 = vld [vmem:[#allocation5 + $0x30] sm:$0xff]
        %v1205 = vld [vmem:[#allocation5 + $0x38] sm:$0xff]
        %v1206 = vld [vmem:[#allocation5 + $0x40] sm:$0xff]
        %v1207 = vld [vmem:[#allocation5 + $0x48] sm:$0xff]
        %v1208 = vld [vmem:[#allocation5 + $0x50] sm:$0xff]
        %v1209 = vld [vmem:[#allocation5 + $0x58] sm:$0xff]
        %v1210 = vld [vmem:[#allocation5 + $0x60] sm:$0xff]
        %v1211 = vld [vmem:[#allocation5 + $0x68] sm:$0xff]
        %v1212 = vld [vmem:[#allocation5 + $0x70] sm:$0xff]
        %v1213 = vld [vmem:[#allocation5 + $0x78] sm:$0xff]
        %v1214 = vld [vmem:[#allocation5 + $0x80] sm:$0xff]
        %v1215 = vld [vmem:[#allocation5 + $0x88] sm:$0xff]
        %v1216 = vld [vmem:[#allocation5 + $0x90] sm:$0xff]
        %v1217 = vld [vmem:[#allocation5 + $0x98] sm:$0xff]
        %v1218 = vld [vmem:[#allocation5 + $0xa0] sm:$0xff]
        %v1219 = vld [vmem:[#allocation5 + $0xa8] sm:$0xff]
        %v1220 = vld [vmem:[#allocation5 + $0xb0] sm:$0xff]
        %v1221 = vld [vmem:[#allocation5 + $0xb8] sm:$0xff]
        %v1222 = vld [vmem:[#allocation5 + $0xc0] sm:$0xff]
        %v1223 = vld [vmem:[#allocation5 + $0xc8] sm:$0xff]
        %v1224 = vld [vmem:[#allocation5 + $0xd0] sm:$0xff]
        %v1225 = vld [vmem:[#allocation5 + $0xd8] sm:$0xff]
        %v1226 = vld [vmem:[#allocation5 + $0xe0] sm:$0xff]
        %v1227 = vld [vmem:[#allocation5 + $0xe8] sm:$0xff]
        %v1228 = vld [vmem:[#allocation5 + $0xf0] sm:$0xff]
        %v1229 = vld [vmem:[#allocation5 + $0xf8] sm:$0xff]
        %v1230 = vld [vmem:[#allocation5 + $0x100] sm:$0xff]
        %v1231 = vld [vmem:[#allocation5 + $0x108] sm:$0xff]
        %v1232 = vld [vmem:[#allocation5 + $0x110] sm:$0xff]
        %v1233 = vld [vmem:[#allocation5 + $0x118] sm:$0xff]
        %v1234 = vld [vmem:[#allocation5 + $0x120] sm:$0xff]
        %v1235 = vld [vmem:[#allocation5 + $0x128] sm:$0xff]
        %v1236 = vld [vmem:[#allocation5 + $0x130] sm:$0xff]
        %v1237 = vld [vmem:[#allocation5 + $0x138] sm:$0xff]
        %v1238 = vld [vmem:[#allocation5 + $0x140] sm:$0xff]
        %v1239 = vld [vmem:[#allocation5 + $0x148] sm:$0xff]
        %v1240 = vld [vmem:[#allocation5 + $0x150] sm:$0xff]
        %v1241 = vld [vmem:[#allocation5 + $0x158] sm:$0xff]
        %v1242 = vld [vmem:[#allocation5 + $0x160] sm:$0xff]
        %v1243 = vld [vmem:[#allocation5 + $0x168] sm:$0xff]
        %v1244 = vld [vmem:[#allocation5 + $0x170] sm:$0xff]
        %v1245 = vld [vmem:[#allocation5 + $0x178] sm:$0xff]
        %1246 = vmatprep.subr.mxu0 %v1199
        %1247 = vmatpush1.msra.mxu0 %v1198
        %1248 = vmatprep.subr.mxu0 %v1202
        %1249 = vmatpush1.msra.mxu0 %v1201
        %1250 = vmatprep.subr.mxu0 %v1205
        %1251 = vmatpush1.msra.mxu0 %v1204
        %1252 = vmatprep.subr.mxu0 %v1208
        %1253 = vmatpush1.msra.mxu0 %v1207
        %1254 = vmatprep.subr.mxu0 %v1211
        %1255 = vmatpush1.msra.mxu0 %v1210
        %1256 = vmatprep.subr.mxu0 %v1214
        %1257 = vmatpush1.msra.mxu0 %v1213
        %1258 = vmatprep.subr.mxu0 %v1217
        %1259 = vmatpush1.msra.mxu0 %v1216
        %1260 = vmatprep.subr.mxu0 %v1220
        %1261 = vmatpush1.msra.mxu0 %v1219
        %1262 = vmatprep.subr.mxu0 %v1223
        %1263 = vmatpush1.msra.mxu0 %v1222
        %1264 = vmatprep.subr.mxu0 %v1226
        %1265 = vmatpush1.msra.mxu0 %v1225
        %1266 = vmatprep.subr.mxu0 %v1229
        %1267 = vmatpush1.msra.mxu0 %v1228
        %1268 = vmatprep.subr.mxu0 %v1232
        %1269 = vmatpush1.msra.mxu0 %v1231
        %1270 = vmatprep.subr.mxu0 %v1235
        %1271 = vmatpush1.msra.mxu0 %v1234
        %1272 = vmatprep.subr.mxu0 %v1238
        %1273 = vmatpush1.msra.mxu0 %v1237
        %1274 = vmatprep.subr.mxu0 %v1241
        %1275 = vmatpush1.msra.mxu0 %v1240
        %1276 = vmatprep.subr.mxu0 %v1244
        %1277 = vmatpush1.msra.mxu0 %v1243
        %1278 = vmatprep.subr.mxu0 0.0
        %1279 = vmatpush1.msra.mxu0 0.0
        %1280 = vmatprep.subr.mxu0 0.0
        %1281 = vmatpush1.msra.mxu0 0.0
        %1282 = vmatprep.subr.mxu0 0.0
        %1283 = vmatpush1.msra.mxu0 0.0
        %1284 = vmatprep.subr.mxu0 0.0
        %1285 = vmatpush1.msra.mxu0 0.0
        %1286 = vmatprep.subr.mxu0 0.0
        %1287 = vmatpush1.msra.mxu0 0.0
        %1288 = vmatprep.subr.mxu0 0.0
        %1289 = vmatpush1.msra.mxu0 0.0
        %1290 = vmatprep.subr.mxu0 0.0
        %1291 = vmatpush1.msra.mxu0 0.0
        %1292 = vmatprep.subr.mxu0 0.0
        %1293 = vmatpush1.msra.mxu0 0.0
        %1294 = vmatprep.subr.mxu0 0.0
        %1295 = vmatpush1.msra.mxu0 0.0
        %1296 = vmatprep.subr.mxu0 0.0
        %1297 = vmatpush1.msra.mxu0 0.0
        %1298 = vmatprep.subr.mxu0 0.0
        %1299 = vmatpush1.msra.mxu0 0.0
        %1300 = vmatprep.subr.mxu0 0.0
        %1301 = vmatpush1.msra.mxu0 0.0
        %1302 = vmatprep.subr.mxu0 0.0
        %1303 = vmatpush1.msra.mxu0 0.0
        %1304 = vmatprep.subr.mxu0 0.0
        %1305 = vmatpush1.msra.mxu0 0.0
        %1306 = vmatprep.subr.mxu0 0.0
        %1307 = vmatpush1.msra.mxu0 0.0
        %1308 = vmatprep.subr.mxu0 0.0
        %1309 = vmatpush1.msra.mxu0 0.0
        %1310 = vmatprep.mubr.f32.mxu0 0.0
        %1311 = vmatmul.mubr.f32.gmra.mrb[0].mxu0 %v1043
        %v1312 = vpop.f32.mrb[0].mxu0
        %v1313 = vadd.f32 0.0, %v1312
        %v1314 = vpop.f32.mrb[0].mxu0
        %v1315 = vadd.f32 0.0, %v1314
        %1316 = vdwg.mxu0
        %1317 = vmatprep.subr.mxu0 0.0
        %1318 = vmatpush1.msra.mxu0 %v1200
        %1319 = vmatprep.subr.mxu0 0.0
        %1320 = vmatpush1.msra.mxu0 %v1203
        %1321 = vmatprep.subr.mxu0 0.0
        %1322 = vmatpush1.msra.mxu0 %v1206
        %1323 = vmatprep.subr.mxu0 0.0
        %1324 = vmatpush1.msra.mxu0 %v1209
        %1325 = vmatprep.subr.mxu0 0.0
        %1326 = vmatpush1.msra.mxu0 %v1212
        %1327 = vmatprep.subr.mxu0 0.0
        %1328 = vmatpush1.msra.mxu0 %v1215
        %1329 = vmatprep.subr.mxu0 0.0
        %1330 = vmatpush1.msra.mxu0 %v1218
        %1331 = vmatprep.subr.mxu0 0.0
        %1332 = vmatpush1.msra.mxu0 %v1221
        %1333 = vmatprep.subr.mxu0 0.0
        %1334 = vmatpush1.msra.mxu0 %v1224
        %1335 = vmatprep.subr.mxu0 0.0
        %1336 = vmatpush1.msra.mxu0 %v1227
        %1337 = vmatprep.subr.mxu0 0.0
        %1338 = vmatpush1.msra.mxu0 %v1230
        %1339 = vmatprep.subr.mxu0 0.0
        %1340 = vmatpush1.msra.mxu0 %v1233
        %1341 = vmatprep.subr.mxu0 0.0
        %1342 = vmatpush1.msra.mxu0 %v1236
        %1343 = vmatprep.subr.mxu0 0.0
        %1344 = vmatpush1.msra.mxu0 %v1239
        %1345 = vmatprep.subr.mxu0 0.0
        %1346 = vmatpush1.msra.mxu0 %v1242
        %1347 = vmatprep.subr.mxu0 0.0
        %1348 = vmatpush1.msra.mxu0 %v1245
        %1349 = vmatprep.subr.mxu0 0.0
        %1350 = vmatpush1.msra.mxu0 0.0
        %1351 = vmatprep.subr.mxu0 0.0
        %1352 = vmatpush1.msra.mxu0 0.0
        %1353 = vmatprep.subr.mxu0 0.0
        %1354 = vmatpush1.msra.mxu0 0.0
        %1355 = vmatprep.subr.mxu0 0.0
        %1356 = vmatpush1.msra.mxu0 0.0
        %1357 = vmatprep.subr.mxu0 0.0
        %1358 = vmatpush1.msra.mxu0 0.0
        %1359 = vmatprep.subr.mxu0 0.0
        %1360 = vmatpush1.msra.mxu0 0.0
        %1361 = vmatprep.subr.mxu0 0.0
        %1362 = vmatpush1.msra.mxu0 0.0
        %1363 = vmatprep.subr.mxu0 0.0
        %1364 = vmatpush1.msra.mxu0 0.0
        %1365 = vmatprep.subr.mxu0 0.0
        %1366 = vmatpush1.msra.mxu0 0.0
        %1367 = vmatprep.subr.mxu0 0.0
        %1368 = vmatpush1.msra.mxu0 0.0
        %1369 = vmatprep.subr.mxu0 0.0
        %1370 = vmatpush1.msra.mxu0 0.0
        %1371 = vmatprep.subr.mxu0 0.0
        %1372 = vmatpush1.msra.mxu0 0.0
        %1373 = vmatprep.subr.mxu0 0.0
        %1374 = vmatpush1.msra.mxu0 0.0
        %1375 = vmatprep.subr.mxu0 0.0
        %1376 = vmatpush1.msra.mxu0 0.0
        %1377 = vmatprep.subr.mxu0 0.0
        %1378 = vmatpush1.msra.mxu0 0.0
        %1379 = vmatprep.subr.mxu0 0.0
        %1380 = vmatpush1.msra.mxu0 0.0
        %1381 = vmatprep.mubr.f32.mxu0 0.0
        %1382 = vmatmul.mubr.f32.gmra.mrb[0].mxu0 %v1043
        %v1383 = vpop.f32.mrb[0].mxu0
        %v1384 = vadd.f32 0.0, %v1383
        %v1385 = vpop.f32.mrb[0].mxu0
        %1386 = vdwg.mxu0
        %v1387 = vadd.f32 %v1124, %v1313
        %v1388 = vadd.f32 %v1126, %v1315
        %v1389 = vxor.u32 %v1387, 2147483648
        %v1390 = vxor.u32 %v1388, 2147483648
        %v1391 = vmul.f32 %v1389, 1.442695
        %v1392 = vpow.pop %v1391
        %v1393 = vmul.f32 %v1390, 1.442695
        %v1394 = vpow.pop %v1393
        %v1395 = vadd.f32 %v1392, 1.0
        %v1396 = vadd.f32 %v1394, 1.0
        %v1397 = vrcp.pop %v1395
        %v1398 = vmul.f32 1.0, %v1397
        %v1399 = vrcp.pop %v1396
        %v1400 = vmul.f32 1.0, %v1399
        %v1401 = vadd.f32 %v1384, %v672
        %v1402 = vmul.f32 %v1398, %v1401
        %v1403 = vadd.f32 %v1195, %v1402
        %v1404 = vtanh.pop %v1403
        %v1405 = vsub.f32 %v1043, %v1404
        %v1406 = vmul.f32 %v1400, %v1405
        %v1407 = vadd.f32 %v1404, %v1406
        %s1408 = scalar_lea.vmem %s287, 4
        %1409 = vst [vmem:[%s1408] sm:$0x3] %v1407
        %s1410 = scalar_lea.vmem %s278, 6
        %v1411 = vld [vmem:[%s1410] sm:$0x3]
        %v1412 = vld [vmem:[#allocation3] sm:$0xff]
        %v1413 = vld [vmem:[#allocation3 + $0x8] sm:$0xff]
        %v1414 = vld [vmem:[#allocation3 + $0x10] sm:$0xff]
        %v1415 = vld [vmem:[#allocation3 + $0x18] sm:$0xff]
        %v1416 = vld [vmem:[#allocation3 + $0x20] sm:$0xff]
        %v1417 = vld [vmem:[#allocation3 + $0x28] sm:$0xff]
        %v1419 = vsel %vm320, %v1411, 0
        %1421 = vmatprep.subr.mxu0 %v1413
        %1422 = vmatpush1.msra.mxu0 %v1412
        %1423 = vmatprep.subr.mxu0 %v1416
        %1424 = vmatpush1.msra.mxu0 %v1415
        %1425 = vmatprep.subr.mxu0 0.0
        %1426 = vmatpush1.msra.mxu0 0.0
        %1427 = vmatprep.subr.mxu0 0.0
        %1428 = vmatpush1.msra.mxu0 0.0
        %1429 = vmatprep.subr.mxu0 0.0
        %1430 = vmatpush1.msra.mxu0 0.0
        %1431 = vmatprep.subr.mxu0 0.0
        %1432 = vmatpush1.msra.mxu0 0.0
        %1433 = vmatprep.subr.mxu0 0.0
        %1434 = vmatpush1.msra.mxu0 0.0
        %1435 = vmatprep.subr.mxu0 0.0
        %1436 = vmatpush1.msra.mxu0 0.0
        %1437 = vmatprep.subr.mxu0 0.0
        %1438 = vmatpush1.msra.mxu0 0.0
        %1439 = vmatprep.subr.mxu0 0.0
        %1440 = vmatpush1.msra.mxu0 0.0
        %1441 = vmatprep.subr.mxu0 0.0
        %1442 = vmatpush1.msra.mxu0 0.0
        %1443 = vmatprep.subr.mxu0 0.0
        %1444 = vmatpush1.msra.mxu0 0.0
        %1445 = vmatprep.subr.mxu0 0.0
        %1446 = vmatpush1.msra.mxu0 0.0
        %1447 = vmatprep.subr.mxu0 0.0
        %1448 = vmatpush1.msra.mxu0 0.0
        %1449 = vmatprep.subr.mxu0 0.0
        %1450 = vmatpush1.msra.mxu0 0.0
        %1451 = vmatprep.subr.mxu0 0.0
        %1452 = vmatpush1.msra.mxu0 0.0
        %1453 = vmatprep.subr.mxu0 0.0
        %1454 = vmatpush1.msra.mxu0 0.0
        %1455 = vmatprep.subr.mxu0 0.0
        %1456 = vmatpush1.msra.mxu0 0.0
        %1457 = vmatprep.subr.mxu0 0.0
        %1458 = vmatpush1.msra.mxu0 0.0
        %1459 = vmatprep.subr.mxu0 0.0
        %1460 = vmatpush1.msra.mxu0 0.0
        %1461 = vmatprep.subr.mxu0 0.0
        %1462 = vmatpush1.msra.mxu0 0.0
        %1463 = vmatprep.subr.mxu0 0.0
        %1464 = vmatpush1.msra.mxu0 0.0
        %1465 = vmatprep.subr.mxu0 0.0
        %1466 = vmatpush1.msra.mxu0 0.0
        %1467 = vmatprep.subr.mxu0 0.0
        %1468 = vmatpush1.msra.mxu0 0.0
        %1469 = vmatprep.subr.mxu0 0.0
        %1470 = vmatpush1.msra.mxu0 0.0
        %1471 = vmatprep.subr.mxu0 0.0
        %1472 = vmatpush1.msra.mxu0 0.0
        %1473 = vmatprep.subr.mxu0 0.0
        %1474 = vmatpush1.msra.mxu0 0.0
        %1475 = vmatprep.subr.mxu0 0.0
        %1476 = vmatpush1.msra.mxu0 0.0
        %1477 = vmatprep.subr.mxu0 0.0
        %1478 = vmatpush1.msra.mxu0 0.0
        %1479 = vmatprep.subr.mxu0 0.0
        %1480 = vmatpush1.msra.mxu0 0.0
        %1481 = vmatprep.subr.mxu0 0.0
        %1482 = vmatpush1.msra.mxu0 0.0
        %1483 = vmatprep.subr.mxu0 0.0
        %1484 = vmatpush1.msra.mxu0 0.0
        %1485 = vmatprep.mubr.f32.mxu0 0.0
        %1486 = vmatmul.mubr.f32.gmra.mrb[0].mxu0 %v1419
        %v1487 = vpop.f32.mrb[0].mxu0
        %v1488 = vadd.f32 %v308, %v1487
        %v1489 = vpop.f32.mrb[0].mxu0
        %v1490 = vadd.f32 %v312, %v1489
        %1491 = vdwg.mxu0
        %1492 = vmatprep.subr.mxu0 0.0
        %1493 = vmatpush1.msra.mxu0 %v1414
        %1494 = vmatprep.subr.mxu0 0.0
        %1495 = vmatpush1.msra.mxu0 %v1417
        %1496 = vmatprep.subr.mxu0 0.0
        %1497 = vmatpush1.msra.mxu0 0.0
        %1498 = vmatprep.subr.mxu0 0.0
        %1499 = vmatpush1.msra.mxu0 0.0
        %1500 = vmatprep.subr.mxu0 0.0
        %1501 = vmatpush1.msra.mxu0 0.0
        %1502 = vmatprep.subr.mxu0 0.0
        %1503 = vmatpush1.msra.mxu0 0.0
        %1504 = vmatprep.subr.mxu0 0.0
        %1505 = vmatpush1.msra.mxu0 0.0
        %1506 = vmatprep.subr.mxu0 0.0
        %1507 = vmatpush1.msra.mxu0 0.0
        %1508 = vmatprep.subr.mxu0 0.0
        %1509 = vmatpush1.msra.mxu0 0.0
        %1510 = vmatprep.subr.mxu0 0.0
        %1511 = vmatpush1.msra.mxu0 0.0
        %1512 = vmatprep.subr.mxu0 0.0
        %1513 = vmatpush1.msra.mxu0 0.0
        %1514 = vmatprep.subr.mxu0 0.0
        %1515 = vmatpush1.msra.mxu0 0.0
        %1516 = vmatprep.subr.mxu0 0.0
        %1517 = vmatpush1.msra.mxu0 0.0
        %1518 = vmatprep.subr.mxu0 0.0
        %1519 = vmatpush1.msra.mxu0 0.0
        %1520 = vmatprep.subr.mxu0 0.0
        %1521 = vmatpush1.msra.mxu0 0.0
        %1522 = vmatprep.subr.mxu0 0.0
        %1523 = vmatpush1.msra.mxu0 0.0
        %1524 = vmatprep.subr.mxu0 0.0
        %1525 = vmatpush1.msra.mxu0 0.0
        %1526 = vmatprep.subr.mxu0 0.0
        %1527 = vmatpush1.msra.mxu0 0.0
        %1528 = vmatprep.subr.mxu0 0.0
        %1529 = vmatpush1.msra.mxu0 0.0
        %1530 = vmatprep.subr.mxu0 0.0
        %1531 = vmatpush1.msra.mxu0 0.0
        %1532 = vmatprep.subr.mxu0 0.0
        %1533 = vmatpush1.msra.mxu0 0.0
        %1534 = vmatprep.subr.mxu0 0.0
        %1535 = vmatpush1.msra.mxu0 0.0
        %1536 = vmatprep.subr.mxu0 0.0
        %1537 = vmatpush1.msra.mxu0 0.0
        %1538 = vmatprep.subr.mxu0 0.0
        %1539 = vmatpush1.msra.mxu0 0.0
        %1540 = vmatprep.subr.mxu0 0.0
        %1541 = vmatpush1.msra.mxu0 0.0
        %1542 = vmatprep.subr.mxu0 0.0
        %1543 = vmatpush1.msra.mxu0 0.0
        %1544 = vmatprep.subr.mxu0 0.0
        %1545 = vmatpush1.msra.mxu0 0.0
        %1546 = vmatprep.subr.mxu0 0.0
        %1547 = vmatpush1.msra.mxu0 0.0
        %1548 = vmatprep.subr.mxu0 0.0
        %1549 = vmatpush1.msra.mxu0 0.0
        %1550 = vmatprep.subr.mxu0 0.0
        %1551 = vmatpush1.msra.mxu0 0.0
        %1552 = vmatprep.subr.mxu0 0.0
        %1553 = vmatpush1.msra.mxu0 0.0
        %1554 = vmatprep.subr.mxu0 0.0
        %1555 = vmatpush1.msra.mxu0 0.0
        %1556 = vmatprep.mubr.f32.mxu0 0.0
        %1557 = vmatmul.mubr.f32.gmra.mrb[0].mxu0 %v1419
        %v1558 = vpop.f32.mrb[0].mxu0
        %v1559 = vadd.f32 %v316, %v1558
        %v1560 = vpop.f32.mrb[0].mxu0
        %1561 = vdwg.mxu0
        %v1562 = vld [vmem:[#allocation5] sm:$0xff]
        %v1563 = vld [vmem:[#allocation5 + $0x8] sm:$0xff]
        %v1564 = vld [vmem:[#allocation5 + $0x10] sm:$0xff]
        %v1565 = vld [vmem:[#allocation5 + $0x18] sm:$0xff]
        %v1566 = vld [vmem:[#allocation5 + $0x20] sm:$0xff]
        %v1567 = vld [vmem:[#allocation5 + $0x28] sm:$0xff]
        %v1568 = vld [vmem:[#allocation5 + $0x30] sm:$0xff]
        %v1569 = vld [vmem:[#allocation5 + $0x38] sm:$0xff]
        %v1570 = vld [vmem:[#allocation5 + $0x40] sm:$0xff]
        %v1571 = vld [vmem:[#allocation5 + $0x48] sm:$0xff]
        %v1572 = vld [vmem:[#allocation5 + $0x50] sm:$0xff]
        %v1573 = vld [vmem:[#allocation5 + $0x58] sm:$0xff]
        %v1574 = vld [vmem:[#allocation5 + $0x60] sm:$0xff]
        %v1575 = vld [vmem:[#allocation5 + $0x68] sm:$0xff]
        %v1576 = vld [vmem:[#allocation5 + $0x70] sm:$0xff]
        %v1577 = vld [vmem:[#allocation5 + $0x78] sm:$0xff]
        %v1578 = vld [vmem:[#allocation5 + $0x80] sm:$0xff]
        %v1579 = vld [vmem:[#allocation5 + $0x88] sm:$0xff]
        %v1580 = vld [vmem:[#allocation5 + $0x90] sm:$0xff]
        %v1581 = vld [vmem:[#allocation5 + $0x98] sm:$0xff]
        %v1582 = vld [vmem:[#allocation5 + $0xa0] sm:$0xff]
        %v1583 = vld [vmem:[#allocation5 + $0xa8] sm:$0xff]
        %v1584 = vld [vmem:[#allocation5 + $0xb0] sm:$0xff]
        %v1585 = vld [vmem:[#allocation5 + $0xb8] sm:$0xff]
        %v1586 = vld [vmem:[#allocation5 + $0xc0] sm:$0xff]
        %v1587 = vld [vmem:[#allocation5 + $0xc8] sm:$0xff]
        %v1588 = vld [vmem:[#allocation5 + $0xd0] sm:$0xff]
        %v1589 = vld [vmem:[#allocation5 + $0xd8] sm:$0xff]
        %v1590 = vld [vmem:[#allocation5 + $0xe0] sm:$0xff]
        %v1591 = vld [vmem:[#allocation5 + $0xe8] sm:$0xff]
        %v1592 = vld [vmem:[#allocation5 + $0xf0] sm:$0xff]
        %v1593 = vld [vmem:[#allocation5 + $0xf8] sm:$0xff]
        %v1594 = vld [vmem:[#allocation5 + $0x100] sm:$0xff]
        %v1595 = vld [vmem:[#allocation5 + $0x108] sm:$0xff]
        %v1596 = vld [vmem:[#allocation5 + $0x110] sm:$0xff]
        %v1597 = vld [vmem:[#allocation5 + $0x118] sm:$0xff]
        %v1598 = vld [vmem:[#allocation5 + $0x120] sm:$0xff]
        %v1599 = vld [vmem:[#allocation5 + $0x128] sm:$0xff]
        %v1600 = vld [vmem:[#allocation5 + $0x130] sm:$0xff]
        %v1601 = vld [vmem:[#allocation5 + $0x138] sm:$0xff]
        %v1602 = vld [vmem:[#allocation5 + $0x140] sm:$0xff]
        %v1603 = vld [vmem:[#allocation5 + $0x148] sm:$0xff]
        %v1604 = vld [vmem:[#allocation5 + $0x150] sm:$0xff]
        %v1605 = vld [vmem:[#allocation5 + $0x158] sm:$0xff]
        %v1606 = vld [vmem:[#allocation5 + $0x160] sm:$0xff]
        %v1607 = vld [vmem:[#allocation5 + $0x168] sm:$0xff]
        %v1608 = vld [vmem:[#allocation5 + $0x170] sm:$0xff]
        %v1609 = vld [vmem:[#allocation5 + $0x178] sm:$0xff]
        %1610 = vmatprep.subr.mxu0 %v1563
        %1611 = vmatpush1.msra.mxu0 %v1562
        %1612 = vmatprep.subr.mxu0 %v1566
        %1613 = vmatpush1.msra.mxu0 %v1565
        %1614 = vmatprep.subr.mxu0 %v1569
        %1615 = vmatpush1.msra.mxu0 %v1568
        %1616 = vmatprep.subr.mxu0 %v1572
        %1617 = vmatpush1.msra.mxu0 %v1571
        %1618 = vmatprep.subr.mxu0 %v1575
        %1619 = vmatpush1.msra.mxu0 %v1574
        %1620 = vmatprep.subr.mxu0 %v1578
        %1621 = vmatpush1.msra.mxu0 %v1577
        %1622 = vmatprep.subr.mxu0 %v1581
        %1623 = vmatpush1.msra.mxu0 %v1580
        %1624 = vmatprep.subr.mxu0 %v1584
        %1625 = vmatpush1.msra.mxu0 %v1583
        %1626 = vmatprep.subr.mxu0 %v1587
        %1627 = vmatpush1.msra.mxu0 %v1586
        %1628 = vmatprep.subr.mxu0 %v1590
        %1629 = vmatpush1.msra.mxu0 %v1589
        %1630 = vmatprep.subr.mxu0 %v1593
        %1631 = vmatpush1.msra.mxu0 %v1592
        %1632 = vmatprep.subr.mxu0 %v1596
        %1633 = vmatpush1.msra.mxu0 %v1595
        %1634 = vmatprep.subr.mxu0 %v1599
        %1635 = vmatpush1.msra.mxu0 %v1598
        %1636 = vmatprep.subr.mxu0 %v1602
        %1637 = vmatpush1.msra.mxu0 %v1601
        %1638 = vmatprep.subr.mxu0 %v1605
        %1639 = vmatpush1.msra.mxu0 %v1604
        %1640 = vmatprep.subr.mxu0 %v1608
        %1641 = vmatpush1.msra.mxu0 %v1607
        %1642 = vmatprep.subr.mxu0 0.0
        %1643 = vmatpush1.msra.mxu0 0.0
        %1644 = vmatprep.subr.mxu0 0.0
        %1645 = vmatpush1.msra.mxu0 0.0
        %1646 = vmatprep.subr.mxu0 0.0
        %1647 = vmatpush1.msra.mxu0 0.0
        %1648 = vmatprep.subr.mxu0 0.0
        %1649 = vmatpush1.msra.mxu0 0.0
        %1650 = vmatprep.subr.mxu0 0.0
        %1651 = vmatpush1.msra.mxu0 0.0
        %1652 = vmatprep.subr.mxu0 0.0
        %1653 = vmatpush1.msra.mxu0 0.0
        %1654 = vmatprep.subr.mxu0 0.0
        %1655 = vmatpush1.msra.mxu0 0.0
        %1656 = vmatprep.subr.mxu0 0.0
        %1657 = vmatpush1.msra.mxu0 0.0
        %1658 = vmatprep.subr.mxu0 0.0
        %1659 = vmatpush1.msra.mxu0 0.0
        %1660 = vmatprep.subr.mxu0 0.0
        %1661 = vmatpush1.msra.mxu0 0.0
        %1662 = vmatprep.subr.mxu0 0.0
        %1663 = vmatpush1.msra.mxu0 0.0
        %1664 = vmatprep.subr.mxu0 0.0
        %1665 = vmatpush1.msra.mxu0 0.0
        %1666 = vmatprep.subr.mxu0 0.0
        %1667 = vmatpush1.msra.mxu0 0.0
        %1668 = vmatprep.subr.mxu0 0.0
        %1669 = vmatpush1.msra.mxu0 0.0
        %1670 = vmatprep.subr.mxu0 0.0
        %1671 = vmatpush1.msra.mxu0 0.0
        %1672 = vmatprep.subr.mxu0 0.0
        %1673 = vmatpush1.msra.mxu0 0.0
        %1674 = vmatprep.mubr.f32.mxu0 0.0
        %1675 = vmatmul.mubr.f32.gmra.mrb[0].mxu0 %v1407
        %v1676 = vpop.f32.mrb[0].mxu0
        %v1677 = vadd.f32 0.0, %v1676
        %v1678 = vpop.f32.mrb[0].mxu0
        %v1679 = vadd.f32 0.0, %v1678
        %1680 = vdwg.mxu0
        %1681 = vmatprep.subr.mxu0 0.0
        %1682 = vmatpush1.msra.mxu0 %v1564
        %1683 = vmatprep.subr.mxu0 0.0
        %1684 = vmatpush1.msra.mxu0 %v1567
        %1685 = vmatprep.subr.mxu0 0.0
        %1686 = vmatpush1.msra.mxu0 %v1570
        %1687 = vmatprep.subr.mxu0 0.0
        %1688 = vmatpush1.msra.mxu0 %v1573
        %1689 = vmatprep.subr.mxu0 0.0
        %1690 = vmatpush1.msra.mxu0 %v1576
        %1691 = vmatprep.subr.mxu0 0.0
        %1692 = vmatpush1.msra.mxu0 %v1579
        %1693 = vmatprep.subr.mxu0 0.0
        %1694 = vmatpush1.msra.mxu0 %v1582
        %1695 = vmatprep.subr.mxu0 0.0
        %1696 = vmatpush1.msra.mxu0 %v1585
        %1697 = vmatprep.subr.mxu0 0.0
        %1698 = vmatpush1.msra.mxu0 %v1588
        %1699 = vmatprep.subr.mxu0 0.0
        %1700 = vmatpush1.msra.mxu0 %v1591
        %1701 = vmatprep.subr.mxu0 0.0
        %1702 = vmatpush1.msra.mxu0 %v1594
        %1703 = vmatprep.subr.mxu0 0.0
        %1704 = vmatpush1.msra.mxu0 %v1597
        %1705 = vmatprep.subr.mxu0 0.0
        %1706 = vmatpush1.msra.mxu0 %v1600
        %1707 = vmatprep.subr.mxu0 0.0
        %1708 = vmatpush1.msra.mxu0 %v1603
        %1709 = vmatprep.subr.mxu0 0.0
        %1710 = vmatpush1.msra.mxu0 %v1606
        %1711 = vmatprep.subr.mxu0 0.0
        %1712 = vmatpush1.msra.mxu0 %v1609
        %1713 = vmatprep.subr.mxu0 0.0
        %1714 = vmatpush1.msra.mxu0 0.0
        %1715 = vmatprep.subr.mxu0 0.0
        %1716 = vmatpush1.msra.mxu0 0.0
        %1717 = vmatprep.subr.mxu0 0.0
        %1718 = vmatpush1.msra.mxu0 0.0
        %1719 = vmatprep.subr.mxu0 0.0
        %1720 = vmatpush1.msra.mxu0 0.0
        %1721 = vmatprep.subr.mxu0 0.0
        %1722 = vmatpush1.msra.mxu0 0.0
        %1723 = vmatprep.subr.mxu0 0.0
        %1724 = vmatpush1.msra.mxu0 0.0
        %1725 = vmatprep.subr.mxu0 0.0
        %1726 = vmatpush1.msra.mxu0 0.0
        %1727 = vmatprep.subr.mxu0 0.0
        %1728 = vmatpush1.msra.mxu0 0.0
        %1729 = vmatprep.subr.mxu0 0.0
        %1730 = vmatpush1.msra.mxu0 0.0
        %1731 = vmatprep.subr.mxu0 0.0
        %1732 = vmatpush1.msra.mxu0 0.0
        %1733 = vmatprep.subr.mxu0 0.0
        %1734 = vmatpush1.msra.mxu0 0.0
        %1735 = vmatprep.subr.mxu0 0.0
        %1736 = vmatpush1.msra.mxu0 0.0
        %1737 = vmatprep.subr.mxu0 0.0
        %1738 = vmatpush1.msra.mxu0 0.0
        %1739 = vmatprep.subr.mxu0 0.0
        %1740 = vmatpush1.msra.mxu0 0.0
        %1741 = vmatprep.subr.mxu0 0.0
        %1742 = vmatpush1.msra.mxu0 0.0
        %1743 = vmatprep.subr.mxu0 0.0
        %1744 = vmatpush1.msra.mxu0 0.0
        %1745 = vmatprep.mubr.f32.mxu0 0.0
        %1746 = vmatmul.mubr.f32.gmra.mrb[0].mxu0 %v1407
        %v1747 = vpop.f32.mrb[0].mxu0
        %v1748 = vadd.f32 0.0, %v1747
        %v1749 = vpop.f32.mrb[0].mxu0
        %1750 = vdwg.mxu0
        %v1751 = vadd.f32 %v1488, %v1677
        %v1752 = vadd.f32 %v1490, %v1679
        %v1753 = vxor.u32 %v1751, 2147483648
        %v1754 = vxor.u32 %v1752, 2147483648
        %v1755 = vmul.f32 %v1753, 1.442695
        %v1756 = vpow.pop %v1755
        %v1757 = vmul.f32 %v1754, 1.442695
        %v1758 = vpow.pop %v1757
        %v1759 = vadd.f32 %v1756, 1.0
        %v1760 = vadd.f32 %v1758, 1.0
        %v1761 = vrcp.pop %v1759
        %v1762 = vmul.f32 1.0, %v1761
        %v1763 = vrcp.pop %v1760
        %v1764 = vmul.f32 1.0, %v1763
        %v1765 = vadd.f32 %v1748, %v672
        %v1766 = vmul.f32 %v1762, %v1765
        %v1767 = vadd.f32 %v1559, %v1766
        %v1768 = vtanh.pop %v1767
        %v1769 = vsub.f32 %v1407, %v1768
        %v1770 = vmul.f32 %v1764, %v1769
        %v1771 = vadd.f32 %v1768, %v1770
        %s1772 = scalar_lea.vmem %s287, 6
        %1773 = vst [vmem:[%s1772] sm:$0x3] %v1771
        %1774 = vst [vmem:[#allocation2] sm:$0x3] %v1771
        %s1775 = smul.u32 4, %s23
        %p1776 = scmp.lt.s32.totalorder %s1775, 7
        %s1777 = scalar_select %p1776, %s1775, 7
        %p1778 = scmp.lt.s32.totalorder %s22, 0
        %s1779 = scalar_select %p1778, %s22, 0
        %s1780 = sadd.s32 %s1779, %s1777
        %s1781 = smul.addr %s1780, 2
        %s1782 = scalar_lea.vmem %s5, %s1781
        // Predicated region
        $region53: #{_lambda_.1} parent=39 // pred_check
          %p1783 = pneg %p162
        $region54: #{_lambda_.1} parent=39 // pred_check_branch
          %1785 = sbr.rel (%p1783) target = $region56
        $region55: #{_lambda_.1} parent=39 // pred_region
          %s1786 = smul.u32 4, %s23
        $region56: #{_lambda_.1} parent=39 // pred_fallthru
          _
      $region40: #{_lambda_.1} parent=5 // pred_fallthru
        _
      %p1787 = scmp.le.s32.totalorder 2, %s13
      // Predicated region
      $region57: #{_lambda_.1} parent=5 // pred_check
        %p1788 = pneg %p1787
      $region58: #{_lambda_.1} parent=5 // pred_check_branch
        %1790 = sbr.rel (%p1788) target = $region60
      $region59: #{_lambda_.1} parent=5 // pred_region
        %s1791 = ssub.s32 %s13, 2
        // Predicated region
        $region61: #{_lambda_.1} parent=59 // pred_check
          %p1792 = pneg %p168
        $region62: #{_lambda_.1} parent=59 // pred_check_branch
          %1794 = sbr.rel (%p1792) target = $region64
        $region63: #{_lambda_.1} parent=59 // pred_region
          %s1795 = smul.u32 4, %s25
          %p1796 = scmp.lt.s32.totalorder %s1795, 7
          %s1797 = scalar_select %p1796, %s1795, 7
          %p1798 = scmp.lt.s32.totalorder %s24, 0
          %s1799 = scalar_select %p1798, %s24, 0
          %s1800 = sadd.s32 %s1799, %s1797
          %s1801 = smul.addr %s1800, 2
          %s1802 = scalar_lea.vmem %s5, %s1801
        $region64: #{_lambda_.1} parent=59 // pred_fallthru
          _
      $region60: #{_lambda_.1} parent=5 // pred_fallthru
        _
    $region6: #{_lambda_.1} parent=1 // loop_footer
      %s17 = sadd.s32 1, %s13
    $region7: #{_lambda_.1} parent=1 // loop_footer_branch
      %12 = sbr.rel target = $region3
    $region8: #{_lambda_.1} parent=1 // loop_exit
      _
    %1803 = vsyncpa [#allocation4], 1
    %s1804 = scalar_lea.sflag [#allocation4], 1
    %1805 = vsyncpa %s1804, 1
    %1806 = vsyncpa [#allocation6], 1

</llo_original>
